<compile_context>
chip_gen: v7x
topology: tpu7x:2x2x1
jax: 0.10.0
libtpu: 0.0.40
codegen_flags: <defaults>
</compile_context>

<pallas_src>
import functools

import jax
import jax.numpy as jnp
from jax import lax
from jax.experimental import pallas as pl
from jax.experimental.pallas import tpu as pltpu


def _round_up(x, m):
    return ((x + m - 1) // m) * m


# ----------------------------- Pallas kernel ------------------------------


def bigru_kernel(x2d_ref, x_last_ref, wi_f_ref, wi_b_ref, bi_f_ref, bi_b_ref,
                 wh_f_ref, bhn_f_ref, bhn_b_ref,
                 wfc_f_ref, wfc_b_ref, bfc_ref,
                 o_ref,
                 gif_scr, *, seq_len, batch, hidden, n_off):
    T, B, H = seq_len, batch, hidden
    NOFF = n_off  # lane offset (multiple of 128) of the n-gate column block

    # ---- Hoisted forward input projection: ONE bf16 MXU matmul over all timesteps. ----
    # x2d: (T*B, E) bf16, wi_f: (E, GP) bf16 packed as [r|z|pad][n|pad]; f32 accumulate.
    # bi_f already holds b_ih + b_hh for r,z and b_ih for n (b_hh_n stays h-side).
    # GP is a multiple of 128, so this store is a lane-dense, unmasked vst.
    gif_scr[...] = jnp.dot(x2d_ref[...], wi_f_ref[...],
                           preferred_element_type=jnp.float32) + bi_f_ref[...]

    # ---- Backward direction: only output[-1] is consumed, i.e. the backward hidden after
    # its FIRST step (original time T-1) starting from h0 = 0. The rest of the backward
    # recurrence is dead and is removed explicitly (no backward scratch, no wh_b, and the
    # hidden matmul vanishes because h0 == 0). ----
    gib = jnp.dot(x_last_ref[...], wi_b_ref[...],
                  preferred_element_type=jnp.float32) + bi_b_ref[...]       # (B, GP)
    rz_b = jax.nn.sigmoid(gib[:, :2 * H])                 # r and z in one EUP pass
    r_b = rz_b[:, :H]
    z_b = rz_b[:, H:2 * H]
    n_b = jnp.tanh(gib[:, NOFF:NOFF + H] + r_b * bhn_b_ref[...])
    h_b = (1.0 - z_b) * n_b                               # (1-z)*n + z*0

    # ---- Forward recurrence. Hoist the (1,H)->(B,H) broadcast out of the loop
    # (JAX does not CSE broadcast_in_dim inside loops). ----
    bhn_f = jnp.broadcast_to(bhn_f_ref[...], (B, H))
    wh_f = wh_f_ref[...]                                  # (H, GP), f32

    h_f = jnp.zeros((B, H), jnp.float32)
    # Full static unroll: T is small; per step only a (B,H)x(H,GP) MXU push, 2 EUP pushes
    # (fused rz sigmoid + n tanh) and a handful of VPU ops remain on the serial chain.
    for t in range(T):
        gi = gif_scr[t * B:(t + 1) * B, :]                                  # (B, GP)
        gh = jnp.dot(h_f, wh_f, preferred_element_type=jnp.float32)        # (B, GP)
        rz = jax.nn.sigmoid(gi[:, :2 * H] + gh[:, :2 * H])                 # 1 EUP pass
        r = rz[:, :H]
        z = rz[:, H:2 * H]
        n = jnp.tanh(gi[:, NOFF:NOFF + H] + r * (gh[:, NOFF:NOFF + H] + bhn_f))
        h_f = n + z * (h_f - n)                           # == (1-z)*n + z*h

    # ---- Fused FC epilogue: fc([h_f_final | h_b@t=T-1]). Two (B,H)x(H,O) matmuls avoid a
    # lane concat; only this (B, O) slab goes back to HBM. ----
    o_ref[...] = (jnp.dot(h_f, wfc_f_ref[...], preferred_element_type=jnp.float32)
                  + jnp.dot(h_b, wfc_b_ref[...], preferred_element_type=jnp.float32)
                  + bfc_ref[...])


# ------------------------------- wrapper ------------------------------------


def bigru_forward(text, params, *, embedding_dim, hidden_dim, output_dim):
    """text: int32 [T, B]. Returns fc(output[-1]) of shape [B, output_dim]."""
    T, B = text.shape
    E, H, O = embedding_dim, hidden_dim, output_dim

    # Lane-aligned gate packing: [r|z] padded to a 128 multiple, then [n] padded likewise.
    rz_pad = _round_up(2 * H, 128)
    n_pad = _round_up(H, 128)
    GP = rz_pad + n_pad

    # Embedding lookup (gather) -- plain JAX glue.
    emb = jnp.take(params["embedding"], text, axis=0)                 # (T, B, E) f32
    x2d = emb.reshape(T * B, E).astype(jnp.bfloat16)                  # bf16 MXU operands
    x_last = x2d[(T - 1) * B:]                                        # (B, E) time T-1 block

    def gate_pack_cols(w3h_t):
        # (rows, 3H) with [r|z|n] columns -> (rows, GP) lane-aligned layout.
        rz = jnp.pad(w3h_t[:, :2 * H], ((0, 0), (0, rz_pad - 2 * H)))
        n = jnp.pad(w3h_t[:, 2 * H:], ((0, 0), (0, n_pad - H)))
        return jnp.concatenate([rz, n], axis=1)

    def gate_pack_bias(b_ih, b_hh):
        # r,z: b_ih + b_hh folds into one bias; n: only b_ih (b_hh_n stays h-side,
        # inside r * (h @ W_hn + b_hn)).
        b = jnp.concatenate([b_ih[:2 * H] + b_hh[:2 * H], b_ih[2 * H:]])
        return gate_pack_cols(b.reshape(1, 3 * H))

    wi_f = gate_pack_cols(params["w_ih_f"].T).astype(jnp.bfloat16)    # (E, GP) bf16
    wi_b = gate_pack_cols(params["w_ih_b"].T).astype(jnp.bfloat16)    # (E, GP) bf16
    bi_f = gate_pack_bias(params["b_ih_f"], params["b_hh_f"])         # (1, GP) f32
    bi_b = gate_pack_bias(params["b_ih_b"], params["b_hh_b"])         # (1, GP) f32
    wh_f = gate_pack_cols(params["w_hh_f"].T)                         # (H, GP) f32
    bhn_f = params["b_hh_f"][2 * H:].reshape(1, H)
    bhn_b = params["b_hh_b"][2 * H:].reshape(1, H)
    w_fc_t = params["w_fc"].T                                         # (2H, O)
    wfc_f, wfc_b = w_fc_t[:H], w_fc_t[H:]                             # (H, O) each
    b_fc = params["b_fc"].reshape(1, O)

    kernel = functools.partial(bigru_kernel, seq_len=T, batch=B, hidden=H,
                               n_off=rz_pad)

    # Grid-less call: every operand is one full block resident in VMEM (no grid, so no
    # double-buffering of the weights). VMEM budget ~ T*B*(E*2 + GP*4) bytes + weights;
    # tile T with a grid / emit_pipeline if that ever approaches the per-chip limit.
    return pl.pallas_call(
        kernel,
        out_shape=jax.ShapeDtypeStruct((B, O), jnp.float32),
        scratch_shapes=[pltpu.VMEM((T * B, GP), jnp.float32)],        # fwd gate projections
    )(x2d, x_last, wi_f, wi_b, bi_f, bi_b, wh_f, bhn_f, bhn_b,
      wfc_f, wfc_b, b_fc)


# ----------------------------- reference (JAX) -------------------------------


def bigru_reference(text, params, *, hidden_dim):
    H = hidden_dim
    emb = jnp.take(params["embedding"], text, axis=0)  # (T, B, E)
    B = emb.shape[1]

    def cell(h, x, wi, wh, bi, bh):
        gi = x @ wi.T + bi
        gh = h @ wh.T + bh
        r = jax.nn.sigmoid(gi[:, :H] + gh[:, :H])
        z = jax.nn.sigmoid(gi[:, H:2 * H] + gh[:, H:2 * H])
        n = jnp.tanh(gi[:, 2 * H:] + r * gh[:, 2 * H:])
        return (1.0 - z) * n + z * h

    def scan_dir(xs, wi, wh, bi, bh):
        def step(h, x):
            h = cell(h, x, wi, wh, bi, bh)
            return h, h
        h0 = jnp.zeros((B, H), jnp.float32)
        _, ys = lax.scan(step, h0, xs)
        return ys

    out_f = scan_dir(emb, params["w_ih_f"], params["w_hh_f"],
                     params["b_ih_f"], params["b_hh_f"])
    out_b = scan_dir(emb[::-1], params["w_ih_b"], params["w_hh_b"],
                     params["b_ih_b"], params["b_hh_b"])[::-1]
    last = jnp.concatenate([out_f[-1], out_b[-1]], axis=-1)
    return last @ params["w_fc"].T + params["b_fc"]


# --------------------------------- main --------------------------------------


if __name__ == "__main__":
    # Small deterministic config.
    INPUT_DIM = 50        # vocab size
    EMBEDDING_DIM = 16
    HIDDEN_DIM = 32
    OUTPUT_DIM = 5
    T, B = 8, 8           # seq_len, batch

    key = jax.random.PRNGKey(0)
    ks = jax.random.split(key, 12)
    scale = 1.0 / jnp.sqrt(HIDDEN_DIM)

    def u(k, shape):
        return jax.random.uniform(k, shape, jnp.float32, -scale, scale)

    params = {
        "embedding": jax.random.normal(ks[0], (INPUT_DIM, EMBEDDING_DIM), jnp.float32),
        # forward direction (gate order [r, z, n], PyTorch layout)
        "w_ih_f": u(ks[1], (3 * HIDDEN_DIM, EMBEDDING_DIM)),
        "w_hh_f": u(ks[2], (3 * HIDDEN_DIM, HIDDEN_DIM)),
        "b_ih_f": u(ks[3], (3 * HIDDEN_DIM,)),
        "b_hh_f": u(ks[4], (3 * HIDDEN_DIM,)),
        # reverse direction
        "w_ih_b": u(ks[5], (3 * HIDDEN_DIM, EMBEDDING_DIM)),
        "w_hh_b": u(ks[6], (3 * HIDDEN_DIM, HIDDEN_DIM)),
        "b_ih_b": u(ks[7], (3 * HIDDEN_DIM,)),
        "b_hh_b": u(ks[8], (3 * HIDDEN_DIM,)),
        # final linear: (output_dim, 2*hidden_dim)
        "w_fc": u(ks[9], (OUTPUT_DIM, 2 * HIDDEN_DIM)),
        "b_fc": u(ks[10], (OUTPUT_DIM,)),
    }

    text = jax.random.randint(ks[11], (T, B), 0, INPUT_DIM, dtype=jnp.int32)

    out = bigru_forward(text, params,
                        embedding_dim=EMBEDDING_DIM,
                        hidden_dim=HIDDEN_DIM,
                        output_dim=OUTPUT_DIM)
    out = jax.block_until_ready(out)

    ref = jax.block_until_ready(bigru_reference(text, params, hidden_dim=HIDDEN_DIM))
    assert out.shape == (B, OUTPUT_DIM), out.shape
    # Tolerance accounts for the bf16-operand (f32-accumulate) input projection.
    assert jnp.allclose(out, ref, rtol=2e-2, atol=2e-2), (
        f"max abs err {jnp.max(jnp.abs(out - ref))}")

    print("KERNEL_OK")
</pallas_src>

<mosaic_0001>
module attributes {stable_mosaic.version = 11 : i64} {
  func.func @bigru_kernel(%arg0: memref<64x16xbf16, #tpu.memory_space<vmem>>, %arg1: memref<8x16xbf16, #tpu.memory_space<vmem>>, %arg2: memref<16x256xbf16, #tpu.memory_space<vmem>>, %arg3: memref<16x256xbf16, #tpu.memory_space<vmem>>, %arg4: memref<1x256xf32, #tpu.memory_space<vmem>>, %arg5: memref<1x256xf32, #tpu.memory_space<vmem>>, %arg6: memref<32x256xf32, #tpu.memory_space<vmem>>, %arg7: memref<1x32xf32, #tpu.memory_space<vmem>>, %arg8: memref<1x32xf32, #tpu.memory_space<vmem>>, %arg9: memref<32x5xf32, #tpu.memory_space<vmem>>, %arg10: memref<32x5xf32, #tpu.memory_space<vmem>>, %arg11: memref<1x5xf32, #tpu.memory_space<vmem>>, %arg12: memref<8x5xf32, #tpu.memory_space<vmem>>, %arg13: memref<64x256xf32, #tpu.memory_space<vmem>>) attributes {dimension_semantics = [], scalar_prefetch = 0 : i64, scratch_operands = 1 : i64, tpu.core_type = #tpu.core_type<tc>} {
    %c0 = arith.constant 0 : index
    %c0_0 = arith.constant 0 : index
    %0 = vector.load %arg0[%c0, %c0_0] : memref<64x16xbf16, #tpu.memory_space<vmem>>, vector<64x16xbf16>
    %c0_1 = arith.constant 0 : index
    %c0_2 = arith.constant 0 : index
    %1 = vector.load %arg2[%c0_1, %c0_2] : memref<16x256xbf16, #tpu.memory_space<vmem>>, vector<16x256xbf16>
    %cst = arith.constant dense<0.000000e+00> : vector<64x256xf32>
    %2 = tpu.matmul %0, %1, %cst {dimension_numbers = #tpu.dot_dimension_numbers<[1], [0], [0], [1], [0, 0, 1, 1], [], []>} : vector<64x16xbf16>, vector<16x256xbf16>, vector<64x256xf32> -> vector<64x256xf32>
    %c0_3 = arith.constant 0 : index
    %c0_4 = arith.constant 0 : index
    %3 = vector.load %arg4[%c0_3, %c0_4] : memref<1x256xf32, #tpu.memory_space<vmem>>, vector<1x256xf32>
    %4 = vector.broadcast %3 : vector<1x256xf32> to vector<64x256xf32>
    %5 = arith.addf %2, %4 : vector<64x256xf32>
    %c0_5 = arith.constant 0 : index
    %c0_6 = arith.constant 0 : index
    %6 = vector.load %arg13[%c0_5, %c0_6] : memref<64x256xf32, #tpu.memory_space<vmem>>, vector<64x256xf32>
    tpu.vector_store %arg13[%c0_5, %c0_6], %5 {strides = array<i32>} : memref<64x256xf32, #tpu.memory_space<vmem>>, vector<64x256xf32>,
    %c0_7 = arith.constant 0 : index
    %c0_8 = arith.constant 0 : index
    %7 = vector.load %arg1[%c0_7, %c0_8] : memref<8x16xbf16, #tpu.memory_space<vmem>>, vector<8x16xbf16>
    %c0_9 = arith.constant 0 : index
    %c0_10 = arith.constant 0 : index
    %8 = vector.load %arg3[%c0_9, %c0_10] : memref<16x256xbf16, #tpu.memory_space<vmem>>, vector<16x256xbf16>
    %cst_11 = arith.constant dense<0.000000e+00> : vector<8x256xf32>
    %9 = tpu.matmul %7, %8, %cst_11 {dimension_numbers = #tpu.dot_dimension_numbers<[1], [0], [0], [1], [0, 0, 1, 1], [], []>} : vector<8x16xbf16>, vector<16x256xbf16>, vector<8x256xf32> -> vector<8x256xf32>
    %c0_12 = arith.constant 0 : index
    %c0_13 = arith.constant 0 : index
    %10 = vector.load %arg5[%c0_12, %c0_13] : memref<1x256xf32, #tpu.memory_space<vmem>>, vector<1x256xf32>
    %11 = vector.broadcast %10 : vector<1x256xf32> to vector<8x256xf32>
    %12 = arith.addf %9, %11 : vector<8x256xf32>
    %13 = vector.extract_strided_slice %12 {offsets = [0, 0], sizes = [8, 64], strides = [1, 1]} : vector<8x256xf32> to vector<8x64xf32>
    %14 = arith.negf %13 : vector<8x64xf32>
    %15 = math.exp %14 : vector<8x64xf32>
    %cst_14 = arith.constant 1.000000e+00 : f32
    %16 = vector.broadcast %cst_14 : f32 to vector<8x64xf32>
    %17 = arith.addf %16, %15 : vector<8x64xf32>
    %18 = arith.divf %16, %17 : vector<8x64xf32>
    %19 = vector.extract_strided_slice %18 {offsets = [0, 0], sizes = [8, 32], strides = [1, 1]} : vector<8x64xf32> to vector<8x32xf32>
    %20 = vector.extract_strided_slice %18 {offsets = [0, 32], sizes = [8, 32], strides = [1, 1]} : vector<8x64xf32> to vector<8x32xf32>
    %21 = vector.extract_strided_slice %12 {offsets = [0, 128], sizes = [8, 32], strides = [1, 1]} : vector<8x256xf32> to vector<8x32xf32>
    %c0_15 = arith.constant 0 : index
    %c0_16 = arith.constant 0 : index
    %22 = vector.load %arg8[%c0_15, %c0_16] : memref<1x32xf32, #tpu.memory_space<vmem>>, vector<1x32xf32>
    %23 = vector.broadcast %22 : vector<1x32xf32> to vector<8x32xf32>
    %24 = arith.mulf %19, %23 : vector<8x32xf32>
    %25 = arith.addf %21, %24 : vector<8x32xf32>
    %26 = math.tanh %25 : vector<8x32xf32>
    %cst_17 = arith.constant 1.000000e+00 : f32
    %27 = vector.broadcast %cst_17 : f32 to vector<8x32xf32>
    %28 = arith.subf %27, %20 : vector<8x32xf32>
    %29 = arith.mulf %28, %26 : vector<8x32xf32>
    %c0_18 = arith.constant 0 : index
    %c0_19 = arith.constant 0 : index
    %30 = vector.load %arg7[%c0_18, %c0_19] : memref<1x32xf32, #tpu.memory_space<vmem>>, vector<1x32xf32>
    %31 = vector.shape_cast %30 : vector<1x32xf32> to vector<1x32xf32>
    %32 = vector.broadcast %31 : vector<1x32xf32> to vector<8x32xf32>
    %c0_20 = arith.constant 0 : index
    %c0_21 = arith.constant 0 : index
    %33 = vector.load %arg6[%c0_20, %c0_21] : memref<32x256xf32, #tpu.memory_space<vmem>>, vector<32x256xf32>
    %cst_22 = arith.constant 0.000000e+00 : f32
    %34 = vector.broadcast %cst_22 : f32 to vector<8x32xf32>
    %c0_23 = arith.constant 0 : index
    %c0_24 = arith.constant 0 : index
    %35 = vector.load %arg13[%c0_23, %c0_24] : memref<64x256xf32, #tpu.memory_space<vmem>>, vector<8x256xf32>
    %cst_25 = arith.constant dense<0.000000e+00> : vector<8x256xf32>
    %36 = tpu.matmul %34, %33, %cst_25 {dimension_numbers = #tpu.dot_dimension_numbers<[1], [0], [0], [1], [0, 0, 1, 1], [], []>} : vector<8x32xf32>, vector<32x256xf32>, vector<8x256xf32> -> vector<8x256xf32>
    %37 = vector.extract_strided_slice %35 {offsets = [0, 0], sizes = [8, 64], strides = [1, 1]} : vector<8x256xf32> to vector<8x64xf32>
    %38 = vector.extract_strided_slice %36 {offsets = [0, 0], sizes = [8, 64], strides = [1, 1]} : vector<8x256xf32> to vector<8x64xf32>
    %39 = arith.addf %37, %38 : vector<8x64xf32>
    %40 = arith.negf %39 : vector<8x64xf32>
    %41 = math.exp %40 : vector<8x64xf32>
    %cst_26 = arith.constant 1.000000e+00 : f32
    %42 = vector.broadcast %cst_26 : f32 to vector<8x64xf32>
    %43 = arith.addf %42, %41 : vector<8x64xf32>
    %44 = arith.divf %42, %43 : vector<8x64xf32>
    %45 = vector.extract_strided_slice %44 {offsets = [0, 0], sizes = [8, 32], strides = [1, 1]} : vector<8x64xf32> to vector<8x32xf32>
    %46 = vector.extract_strided_slice %44 {offsets = [0, 32], sizes = [8, 32], strides = [1, 1]} : vector<8x64xf32> to vector<8x32xf32>
    %47 = vector.extract_strided_slice %35 {offsets = [0, 128], sizes = [8, 32], strides = [1, 1]} : vector<8x256xf32> to vector<8x32xf32>
    %48 = vector.extract_strided_slice %36 {offsets = [0, 128], sizes = [8, 32], strides = [1, 1]} : vector<8x256xf32> to vector<8x32xf32>
    %49 = arith.addf %48, %32 : vector<8x32xf32>
    %50 = arith.mulf %45, %49 : vector<8x32xf32>
    %51 = arith.addf %47, %50 : vector<8x32xf32>
    %52 = math.tanh %51 : vector<8x32xf32>
    %53 = arith.subf %34, %52 : vector<8x32xf32>
    %54 = arith.mulf %46, %53 : vector<8x32xf32>
    %55 = arith.addf %52, %54 : vector<8x32xf32>
    %c8 = arith.constant 8 : index
    %c0_27 = arith.constant 0 : index
    %56 = vector.load %arg13[%c8, %c0_27] : memref<64x256xf32, #tpu.memory_space<vmem>>, vector<8x256xf32>
    %cst_28 = arith.constant dense<0.000000e+00> : vector<8x256xf32>
    %57 = tpu.matmul %55, %33, %cst_28 {dimension_numbers = #tpu.dot_dimension_numbers<[1], [0], [0], [1], [0, 0, 1, 1], [], []>} : vector<8x32xf32>, vector<32x256xf32>, vector<8x256xf32> -> vector<8x256xf32>
    %58 = vector.extract_strided_slice %56 {offsets = [0, 0], sizes = [8, 64], strides = [1, 1]} : vector<8x256xf32> to vector<8x64xf32>
    %59 = vector.extract_strided_slice %57 {offsets = [0, 0], sizes = [8, 64], strides = [1, 1]} : vector<8x256xf32> to vector<8x64xf32>
    %60 = arith.addf %58, %59 : vector<8x64xf32>
    %61 = arith.negf %60 : vector<8x64xf32>
    %62 = math.exp %61 : vector<8x64xf32>
    %cst_29 = arith.constant 1.000000e+00 : f32
    %63 = vector.broadcast %cst_29 : f32 to vector<8x64xf32>
    %64 = arith.addf %63, %62 : vector<8x64xf32>
    %65 = arith.divf %63, %64 : vector<8x64xf32>
    %66 = vector.extract_strided_slice %65 {offsets = [0, 0], sizes = [8, 32], strides = [1, 1]} : vector<8x64xf32> to vector<8x32xf32>
    %67 = vector.extract_strided_slice %65 {offsets = [0, 32], sizes = [8, 32], strides = [1, 1]} : vector<8x64xf32> to vector<8x32xf32>
    %68 = vector.extract_strided_slice %56 {offsets = [0, 128], sizes = [8, 32], strides = [1, 1]} : vector<8x256xf32> to vector<8x32xf32>
    %69 = vector.extract_strided_slice %57 {offsets = [0, 128], sizes = [8, 32], strides = [1, 1]} : vector<8x256xf32> to vector<8x32xf32>
    %70 = arith.addf %69, %32 : vector<8x32xf32>
    %71 = arith.mulf %66, %70 : vector<8x32xf32>
    %72 = arith.addf %68, %71 : vector<8x32xf32>
    %73 = math.tanh %72 : vector<8x32xf32>
    %74 = arith.subf %55, %73 : vector<8x32xf32>
    %75 = arith.mulf %67, %74 : vector<8x32xf32>
    %76 = arith.addf %73, %75 : vector<8x32xf32>
    %c16 = arith.constant 16 : index
    %c0_30 = arith.constant 0 : index
    %77 = vector.load %arg13[%c16, %c0_30] : memref<64x256xf32, #tpu.memory_space<vmem>>, vector<8x256xf32>
    %cst_31 = arith.constant dense<0.000000e+00> : vector<8x256xf32>
    %78 = tpu.matmul %76, %33, %cst_31 {dimension_numbers = #tpu.dot_dimension_numbers<[1], [0], [0], [1], [0, 0, 1, 1], [], []>} : vector<8x32xf32>, vector<32x256xf32>, vector<8x256xf32> -> vector<8x256xf32>
    %79 = vector.extract_strided_slice %77 {offsets = [0, 0], sizes = [8, 64], strides = [1, 1]} : vector<8x256xf32> to vector<8x64xf32>
    %80 = vector.extract_strided_slice %78 {offsets = [0, 0], sizes = [8, 64], strides = [1, 1]} : vector<8x256xf32> to vector<8x64xf32>
    %81 = arith.addf %79, %80 : vector<8x64xf32>
    %82 = arith.negf %81 : vector<8x64xf32>
    %83 = math.exp %82 : vector<8x64xf32>
    %cst_32 = arith.constant 1.000000e+00 : f32
    %84 = vector.broadcast %cst_32 : f32 to vector<8x64xf32>
    %85 = arith.addf %84, %83 : vector<8x64xf32>
    %86 = arith.divf %84, %85 : vector<8x64xf32>
    %87 = vector.extract_strided_slice %86 {offsets = [0, 0], sizes = [8, 32], strides = [1, 1]} : vector<8x64xf32> to vector<8x32xf32>
    %88 = vector.extract_strided_slice %86 {offsets = [0, 32], sizes = [8, 32], strides = [1, 1]} : vector<8x64xf32> to vector<8x32xf32>
    %89 = vector.extract_strided_slice %77 {offsets = [0, 128], sizes = [8, 32], strides = [1, 1]} : vector<8x256xf32> to vector<8x32xf32>
    %90 = vector.extract_strided_slice %78 {offsets = [0, 128], sizes = [8, 32], strides = [1, 1]} : vector<8x256xf32> to vector<8x32xf32>
    %91 = arith.addf %90, %32 : vector<8x32xf32>
    %92 = arith.mulf %87, %91 : vector<8x32xf32>
    %93 = arith.addf %89, %92 : vector<8x32xf32>
    %94 = math.tanh %93 : vector<8x32xf32>
    %95 = arith.subf %76, %94 : vector<8x32xf32>
    %96 = arith.mulf %88, %95 : vector<8x32xf32>
    %97 = arith.addf %94, %96 : vector<8x32xf32>
    %c24 = arith.constant 24 : index
    %c0_33 = arith.constant 0 : index
    %98 = vector.load %arg13[%c24, %c0_33] : memref<64x256xf32, #tpu.memory_space<vmem>>, vector<8x256xf32>
    %cst_34 = arith.constant dense<0.000000e+00> : vector<8x256xf32>
    %99 = tpu.matmul %97, %33, %cst_34 {dimension_numbers = #tpu.dot_dimension_numbers<[1], [0], [0], [1], [0, 0, 1, 1], [], []>} : vector<8x32xf32>, vector<32x256xf32>, vector<8x256xf32> -> vector<8x256xf32>
    %100 = vector.extract_strided_slice %98 {offsets = [0, 0], sizes = [8, 64], strides = [1, 1]} : vector<8x256xf32> to vector<8x64xf32>
    %101 = vector.extract_strided_slice %99 {offsets = [0, 0], sizes = [8, 64], strides = [1, 1]} : vector<8x256xf32> to vector<8x64xf32>
    %102 = arith.addf %100, %101 : vector<8x64xf32>
    %103 = arith.negf %102 : vector<8x64xf32>
    %104 = math.exp %103 : vector<8x64xf32>
    %cst_35 = arith.constant 1.000000e+00 : f32
    %105 = vector.broadcast %cst_35 : f32 to vector<8x64xf32>
    %106 = arith.addf %105, %104 : vector<8x64xf32>
    %107 = arith.divf %105, %106 : vector<8x64xf32>
    %108 = vector.extract_strided_slice %107 {offsets = [0, 0], sizes = [8, 32], strides = [1, 1]} : vector<8x64xf32> to vector<8x32xf32>
    %109 = vector.extract_strided_slice %107 {offsets = [0, 32], sizes = [8, 32], strides = [1, 1]} : vector<8x64xf32> to vector<8x32xf32>
    %110 = vector.extract_strided_slice %98 {offsets = [0, 128], sizes = [8, 32], strides = [1, 1]} : vector<8x256xf32> to vector<8x32xf32>
    %111 = vector.extract_strided_slice %99 {offsets = [0, 128], sizes = [8, 32], strides = [1, 1]} : vector<8x256xf32> to vector<8x32xf32>
    %112 = arith.addf %111, %32 : vector<8x32xf32>
    %113 = arith.mulf %108, %112 : vector<8x32xf32>
    %114 = arith.addf %110, %113 : vector<8x32xf32>
    %115 = math.tanh %114 : vector<8x32xf32>
    %116 = arith.subf %97, %115 : vector<8x32xf32>
    %117 = arith.mulf %109, %116 : vector<8x32xf32>
    %118 = arith.addf %115, %117 : vector<8x32xf32>
    %c32 = arith.constant 32 : index
    %c0_36 = arith.constant 0 : index
    %119 = vector.load %arg13[%c32, %c0_36] : memref<64x256xf32, #tpu.memory_space<vmem>>, vector<8x256xf32>
    %cst_37 = arith.constant dense<0.000000e+00> : vector<8x256xf32>
    %120 = tpu.matmul %118, %33, %cst_37 {dimension_numbers = #tpu.dot_dimension_numbers<[1], [0], [0], [1], [0, 0, 1, 1], [], []>} : vector<8x32xf32>, vector<32x256xf32>, vector<8x256xf32> -> vector<8x256xf32>
    %121 = vector.extract_strided_slice %119 {offsets = [0, 0], sizes = [8, 64], strides = [1, 1]} : vector<8x256xf32> to vector<8x64xf32>
    %122 = vector.extract_strided_slice %120 {offsets = [0, 0], sizes = [8, 64], strides = [1, 1]} : vector<8x256xf32> to vector<8x64xf32>
    %123 = arith.addf %121, %122 : vector<8x64xf32>
    %124 = arith.negf %123 : vector<8x64xf32>
    %125 = math.exp %124 : vector<8x64xf32>
    %cst_38 = arith.constant 1.000000e+00 : f32
    %126 = vector.broadcast %cst_38 : f32 to vector<8x64xf32>
    %127 = arith.addf %126, %125 : vector<8x64xf32>
    %128 = arith.divf %126, %127 : vector<8x64xf32>
    %129 = vector.extract_strided_slice %128 {offsets = [0, 0], sizes = [8, 32], strides = [1, 1]} : vector<8x64xf32> to vector<8x32xf32>
    %130 = vector.extract_strided_slice %128 {offsets = [0, 32], sizes = [8, 32], strides = [1, 1]} : vector<8x64xf32> to vector<8x32xf32>
    %131 = vector.extract_strided_slice %119 {offsets = [0, 128], sizes = [8, 32], strides = [1, 1]} : vector<8x256xf32> to vector<8x32xf32>
    %132 = vector.extract_strided_slice %120 {offsets = [0, 128], sizes = [8, 32], strides = [1, 1]} : vector<8x256xf32> to vector<8x32xf32>
    %133 = arith.addf %132, %32 : vector<8x32xf32>
    %134 = arith.mulf %129, %133 : vector<8x32xf32>
    %135 = arith.addf %131, %134 : vector<8x32xf32>
    %136 = math.tanh %135 : vector<8x32xf32>
    %137 = arith.subf %118, %136 : vector<8x32xf32>
    %138 = arith.mulf %130, %137 : vector<8x32xf32>
    %139 = arith.addf %136, %138 : vector<8x32xf32>
    %c40 = arith.constant 40 : index
    %c0_39 = arith.constant 0 : index
    %140 = vector.load %arg13[%c40, %c0_39] : memref<64x256xf32, #tpu.memory_space<vmem>>, vector<8x256xf32>
    %cst_40 = arith.constant dense<0.000000e+00> : vector<8x256xf32>
    %141 = tpu.matmul %139, %33, %cst_40 {dimension_numbers = #tpu.dot_dimension_numbers<[1], [0], [0], [1], [0, 0, 1, 1], [], []>} : vector<8x32xf32>, vector<32x256xf32>, vector<8x256xf32> -> vector<8x256xf32>
    %142 = vector.extract_strided_slice %140 {offsets = [0, 0], sizes = [8, 64], strides = [1, 1]} : vector<8x256xf32> to vector<8x64xf32>
    %143 = vector.extract_strided_slice %141 {offsets = [0, 0], sizes = [8, 64], strides = [1, 1]} : vector<8x256xf32> to vector<8x64xf32>
    %144 = arith.addf %142, %143 : vector<8x64xf32>
    %145 = arith.negf %144 : vector<8x64xf32>
    %146 = math.exp %145 : vector<8x64xf32>
    %cst_41 = arith.constant 1.000000e+00 : f32
    %147 = vector.broadcast %cst_41 : f32 to vector<8x64xf32>
    %148 = arith.addf %147, %146 : vector<8x64xf32>
    %149 = arith.divf %147, %148 : vector<8x64xf32>
    %150 = vector.extract_strided_slice %149 {offsets = [0, 0], sizes = [8, 32], strides = [1, 1]} : vector<8x64xf32> to vector<8x32xf32>
    %151 = vector.extract_strided_slice %149 {offsets = [0, 32], sizes = [8, 32], strides = [1, 1]} : vector<8x64xf32> to vector<8x32xf32>
    %152 = vector.extract_strided_slice %140 {offsets = [0, 128], sizes = [8, 32], strides = [1, 1]} : vector<8x256xf32> to vector<8x32xf32>
    %153 = vector.extract_strided_slice %141 {offsets = [0, 128], sizes = [8, 32], strides = [1, 1]} : vector<8x256xf32> to vector<8x32xf32>
    %154 = arith.addf %153, %32 : vector<8x32xf32>
    %155 = arith.mulf %150, %154 : vector<8x32xf32>
    %156 = arith.addf %152, %155 : vector<8x32xf32>
    %157 = math.tanh %156 : vector<8x32xf32>
    %158 = arith.subf %139, %157 : vector<8x32xf32>
    %159 = arith.mulf %151, %158 : vector<8x32xf32>
    %160 = arith.addf %157, %159 : vector<8x32xf32>
    %c48 = arith.constant 48 : index
    %c0_42 = arith.constant 0 : index
    %161 = vector.load %arg13[%c48, %c0_42] : memref<64x256xf32, #tpu.memory_space<vmem>>, vector<8x256xf32>
    %cst_43 = arith.constant dense<0.000000e+00> : vector<8x256xf32>
    %162 = tpu.matmul %160, %33, %cst_43 {dimension_numbers = #tpu.dot_dimension_numbers<[1], [0], [0], [1], [0, 0, 1, 1], [], []>} : vector<8x32xf32>, vector<32x256xf32>, vector<8x256xf32> -> vector<8x256xf32>
    %163 = vector.extract_strided_slice %161 {offsets = [0, 0], sizes = [8, 64], strides = [1, 1]} : vector<8x256xf32> to vector<8x64xf32>
    %164 = vector.extract_strided_slice %162 {offsets = [0, 0], sizes = [8, 64], strides = [1, 1]} : vector<8x256xf32> to vector<8x64xf32>
    %165 = arith.addf %163, %164 : vector<8x64xf32>
    %166 = arith.negf %165 : vector<8x64xf32>
    %167 = math.exp %166 : vector<8x64xf32>
    %cst_44 = arith.constant 1.000000e+00 : f32
    %168 = vector.broadcast %cst_44 : f32 to vector<8x64xf32>
    %169 = arith.addf %168, %167 : vector<8x64xf32>
    %170 = arith.divf %168, %169 : vector<8x64xf32>
    %171 = vector.extract_strided_slice %170 {offsets = [0, 0], sizes = [8, 32], strides = [1, 1]} : vector<8x64xf32> to vector<8x32xf32>
    %172 = vector.extract_strided_slice %170 {offsets = [0, 32], sizes = [8, 32], strides = [1, 1]} : vector<8x64xf32> to vector<8x32xf32>
    %173 = vector.extract_strided_slice %161 {offsets = [0, 128], sizes = [8, 32], strides = [1, 1]} : vector<8x256xf32> to vector<8x32xf32>
    %174 = vector.extract_strided_slice %162 {offsets = [0, 128], sizes = [8, 32], strides = [1, 1]} : vector<8x256xf32> to vector<8x32xf32>
    %175 = arith.addf %174, %32 : vector<8x32xf32>
    %176 = arith.mulf %171, %175 : vector<8x32xf32>
    %177 = arith.addf %173, %176 : vector<8x32xf32>
    %178 = math.tanh %177 : vector<8x32xf32>
    %179 = arith.subf %160, %178 : vector<8x32xf32>
    %180 = arith.mulf %172, %179 : vector<8x32xf32>
    %181 = arith.addf %178, %180 : vector<8x32xf32>
    %c56 = arith.constant 56 : index
    %c0_45 = arith.constant 0 : index
    %182 = vector.load %arg13[%c56, %c0_45] : memref<64x256xf32, #tpu.memory_space<vmem>>, vector<8x256xf32>
    %cst_46 = arith.constant dense<0.000000e+00> : vector<8x256xf32>
    %183 = tpu.matmul %181, %33, %cst_46 {dimension_numbers = #tpu.dot_dimension_numbers<[1], [0], [0], [1], [0, 0, 1, 1], [], []>} : vector<8x32xf32>, vector<32x256xf32>, vector<8x256xf32> -> vector<8x256xf32>
    %184 = vector.extract_strided_slice %182 {offsets = [0, 0], sizes = [8, 64], strides = [1, 1]} : vector<8x256xf32> to vector<8x64xf32>
    %185 = vector.extract_strided_slice %183 {offsets = [0, 0], sizes = [8, 64], strides = [1, 1]} : vector<8x256xf32> to vector<8x64xf32>
    %186 = arith.addf %184, %185 : vector<8x64xf32>
    %187 = arith.negf %186 : vector<8x64xf32>
    %188 = math.exp %187 : vector<8x64xf32>
    %cst_47 = arith.constant 1.000000e+00 : f32
    %189 = vector.broadcast %cst_47 : f32 to vector<8x64xf32>
    %190 = arith.addf %189, %188 : vector<8x64xf32>
    %191 = arith.divf %189, %190 : vector<8x64xf32>
    %192 = vector.extract_strided_slice %191 {offsets = [0, 0], sizes = [8, 32], strides = [1, 1]} : vector<8x64xf32> to vector<8x32xf32>
    %193 = vector.extract_strided_slice %191 {offsets = [0, 32], sizes = [8, 32], strides = [1, 1]} : vector<8x64xf32> to vector<8x32xf32>
    %194 = vector.extract_strided_slice %182 {offsets = [0, 128], sizes = [8, 32], strides = [1, 1]} : vector<8x256xf32> to vector<8x32xf32>
    %195 = vector.extract_strided_slice %183 {offsets = [0, 128], sizes = [8, 32], strides = [1, 1]} : vector<8x256xf32> to vector<8x32xf32>
    %196 = arith.addf %195, %32 : vector<8x32xf32>
    %197 = arith.mulf %192, %196 : vector<8x32xf32>
    %198 = arith.addf %194, %197 : vector<8x32xf32>
    %199 = math.tanh %198 : vector<8x32xf32>
    %200 = arith.subf %181, %199 : vector<8x32xf32>
    %201 = arith.mulf %193, %200 : vector<8x32xf32>
    %202 = arith.addf %199, %201 : vector<8x32xf32>
    %c0_48 = arith.constant 0 : index
    %c0_49 = arith.constant 0 : index
    %203 = vector.load %arg9[%c0_48, %c0_49] : memref<32x5xf32, #tpu.memory_space<vmem>>, vector<32x5xf32>
    %cst_50 = arith.constant dense<0.000000e+00> : vector<8x5xf32>
    %204 = tpu.matmul %202, %203, %cst_50 {dimension_numbers = #tpu.dot_dimension_numbers<[1], [0], [0], [1], [0, 0, 1, 1], [], []>} : vector<8x32xf32>, vector<32x5xf32>, vector<8x5xf32> -> vector<8x5xf32>
    %c0_51 = arith.constant 0 : index
    %c0_52 = arith.constant 0 : index
    %205 = vector.load %arg10[%c0_51, %c0_52] : memref<32x5xf32, #tpu.memory_space<vmem>>, vector<32x5xf32>
    %cst_53 = arith.constant dense<0.000000e+00> : vector<8x5xf32>
    %206 = tpu.matmul %29, %205, %cst_53 {dimension_numbers = #tpu.dot_dimension_numbers<[1], [0], [0], [1], [0, 0, 1, 1], [], []>} : vector<8x32xf32>, vector<32x5xf32>, vector<8x5xf32> -> vector<8x5xf32>
    %207 = arith.addf %204, %206 : vector<8x5xf32>
    %c0_54 = arith.constant 0 : index
    %c0_55 = arith.constant 0 : index
    %208 = vector.load %arg11[%c0_54, %c0_55] : memref<1x5xf32, #tpu.memory_space<vmem>>, vector<1x5xf32>
    %209 = vector.broadcast %208 : vector<1x5xf32> to vector<8x5xf32>
    %210 = arith.addf %207, %209 : vector<8x5xf32>
    %c0_56 = arith.constant 0 : index
    %c0_57 = arith.constant 0 : index
    %211 = vector.load %arg12[%c0_56, %c0_57] : memref<8x5xf32, #tpu.memory_space<vmem>>, vector<8x5xf32>
    tpu.vector_store %arg12[%c0_56, %c0_57], %210 {strides = array<i32>} : memref<8x5xf32, #tpu.memory_space<vmem>>, vector<8x5xf32>,
    return
  }
}

</mosaic_0001>

<llo_original>
// kernel: tpu_custom_call.1
$region0: #{tpu_custom_call.1}
  #allocation0 [shape = 'u32[]', space=smem, size = 0x4, offset = 0x4, fixed_abs, tag = 'smem constant byte address 0x4 - core index']
  #allocation1 [shape = 'u32[144,128]{1,0:T(1,128)}', space=vmem, size = 0x12000, scoped, tag = 'internal scratch']
  #allocation2 [shape = 'f32[64,256]{1,0:T(8,128)}', space=vmem, size = 0x10000, scoped, tag = 'scratch operand']
  %s0 = inlined_call_operand.vmem [shape: bf16[64,16], index: 0, kind: input, shape index: {}]
  %s1 = inlined_call_operand.vmem [shape: bf16[8,16], index: 1, kind: input, shape index: {}]
  %s2 = inlined_call_operand.vmem [shape: bf16[16,256], index: 2, kind: input, shape index: {}]
  %s3 = inlined_call_operand.vmem [shape: bf16[16,256], index: 3, kind: input, shape index: {}]
  %s4 = inlined_call_operand.vmem [shape: f32[1,256], index: 4, kind: input, shape index: {}]
  %s5 = inlined_call_operand.vmem [shape: f32[1,256], index: 5, kind: input, shape index: {}]
  %s6 = inlined_call_operand.vmem [shape: f32[32,256], index: 6, kind: input, shape index: {}]
  %s7 = inlined_call_operand.vmem [shape: f32[1,32], index: 7, kind: input, shape index: {}]
  %s8 = inlined_call_operand.vmem [shape: f32[1,32], index: 8, kind: input, shape index: {}]
  %s9 = inlined_call_operand.vmem [shape: f32[32,5], index: 9, kind: input, shape index: {}]
  %s10 = inlined_call_operand.vmem [shape: f32[32,5], index: 10, kind: input, shape index: {}]
  %s11 = inlined_call_operand.vmem [shape: f32[1,5], index: 11, kind: input, shape index: {}]
  %s12 = inlined_call_operand.hbm [shape: f32[8,5], index: 12, kind: output, shape index: {}]
  %s13 = sld [smem:[#allocation0]]
  $region58: #{tpu_custom_call.1} parent=0
    _
  %s15 = ssub.s32 1, %s13
  %s16 = scalar_select 0, %s15, %s13
  $region1: #{tpu_custom_call.1} parent=0
    #allocation3 [shape = 'u8[4096]{0}', space=vmem, size = 0x1000, scoped, tag = 'output window, operand 0, single buffered']
    #allocation4 [shape = 's32[1]{0}', space=sflag, size = 0x4, scoped, tag = 'scoped memory for tpu_custom_call.1']
    %17 = vsyncpa [#allocation4], 0
    // Predicated region
    $region2: #{tpu_custom_call.1} parent=1 // pred_check
      _
    $region3: #{tpu_custom_call.1} parent=1 // pred_check_branch
      %19 = sbr.rel (0) target = $region5
    $region4: #{tpu_custom_call.1} parent=1 // pred_region
      _
    $region5: #{tpu_custom_call.1} parent=1 // pred_fallthru
      _
    // Predicated region
    $region6: #{tpu_custom_call.1} parent=1 // pred_check
      _
    $region7: #{tpu_custom_call.1} parent=1 // pred_check_branch
      %21 = sbr.rel (0) target = $region9
    $region8: #{tpu_custom_call.1} parent=1 // pred_region
      _
    $region9: #{tpu_custom_call.1} parent=1 // pred_fallthru
      _
    // Predicated region
    $region10: #{tpu_custom_call.1} parent=1 // pred_check
      _
    $region11: #{tpu_custom_call.1} parent=1 // pred_check_branch
      %23 = sbr.rel (0) target = $region13
    $region12: #{tpu_custom_call.1} parent=1 // pred_region
      _
    $region13: #{tpu_custom_call.1} parent=1 // pred_fallthru
      _
    // Predicated region
    $region14: #{tpu_custom_call.1} parent=1 // pred_check
      _
    $region15: #{tpu_custom_call.1} parent=1 // pred_check_branch
      %25 = sbr.rel (0) target = $region17
    $region16: #{tpu_custom_call.1} parent=1 // pred_region
      _
    $region17: #{tpu_custom_call.1} parent=1 // pred_fallthru
      _
    // Predicated region
    $region18: #{tpu_custom_call.1} parent=1 // pred_check
      _
    $region19: #{tpu_custom_call.1} parent=1 // pred_check_branch
      %27 = sbr.rel (0) target = $region21
    $region20: #{tpu_custom_call.1} parent=1 // pred_region
      _
    $region21: #{tpu_custom_call.1} parent=1 // pred_fallthru
      _
    // Predicated region
    $region22: #{tpu_custom_call.1} parent=1 // pred_check
      _
    $region23: #{tpu_custom_call.1} parent=1 // pred_check_branch
      %29 = sbr.rel (0) target = $region25
    $region24: #{tpu_custom_call.1} parent=1 // pred_region
      _
    $region25: #{tpu_custom_call.1} parent=1 // pred_fallthru
      _
    // Predicated region
    $region26: #{tpu_custom_call.1} parent=1 // pred_check
      _
    $region27: #{tpu_custom_call.1} parent=1 // pred_check_branch
      %31 = sbr.rel (0) target = $region29
    $region28: #{tpu_custom_call.1} parent=1 // pred_region
      _
    $region29: #{tpu_custom_call.1} parent=1 // pred_fallthru
      _
    // Predicated region
    $region30: #{tpu_custom_call.1} parent=1 // pred_check
      _
    $region31: #{tpu_custom_call.1} parent=1 // pred_check_branch
      %33 = sbr.rel (0) target = $region33
    $region32: #{tpu_custom_call.1} parent=1 // pred_region
      _
    $region33: #{tpu_custom_call.1} parent=1 // pred_fallthru
      _
    // Predicated region
    $region34: #{tpu_custom_call.1} parent=1 // pred_check
      _
    $region35: #{tpu_custom_call.1} parent=1 // pred_check_branch
      %35 = sbr.rel (0) target = $region37
    $region36: #{tpu_custom_call.1} parent=1 // pred_region
      _
    $region37: #{tpu_custom_call.1} parent=1 // pred_fallthru
      _
    // Predicated region
    $region38: #{tpu_custom_call.1} parent=1 // pred_check
      _
    $region39: #{tpu_custom_call.1} parent=1 // pred_check_branch
      %37 = sbr.rel (0) target = $region41
    $region40: #{tpu_custom_call.1} parent=1 // pred_region
      _
    $region41: #{tpu_custom_call.1} parent=1 // pred_fallthru
      _
    // Predicated region
    $region42: #{tpu_custom_call.1} parent=1 // pred_check
      _
    $region43: #{tpu_custom_call.1} parent=1 // pred_check_branch
      %39 = sbr.rel (0) target = $region45
    $region44: #{tpu_custom_call.1} parent=1 // pred_region
      _
    $region45: #{tpu_custom_call.1} parent=1 // pred_fallthru
      _
    // Predicated region
    $region46: #{tpu_custom_call.1} parent=1 // pred_check
      _
    $region47: #{tpu_custom_call.1} parent=1 // pred_check_branch
      %41 = sbr.rel (0) target = $region49
    $region48: #{tpu_custom_call.1} parent=1 // pred_region
      _
    $region49: #{tpu_custom_call.1} parent=1 // pred_fallthru
      _
    %v43 = vld [vmem:[%s0] sm:$0xf]
    %v44 = vld [vmem:[%s0 + $0x4] sm:$0xf]
    %v45 = vld [vmem:[%s0 + $0x8] sm:$0xf]
    %v46 = vld [vmem:[%s0 + $0xc] sm:$0xf]
    %v47 = vld [vmem:[%s0 + $0x10] sm:$0xf]
    %v48 = vld [vmem:[%s0 + $0x14] sm:$0xf]
    %v49 = vld [vmem:[%s0 + $0x18] sm:$0xf]
    %v50 = vld [vmem:[%s0 + $0x1c] sm:$0xf]
    %v51 = vld [vmem:[%s2] sm:$0xff]
    %v52 = vld [vmem:[%s2 + $0x8] sm:$0xff]
    %v53 = vld [vmem:[%s4] sm:$0x3]
    %v55 = vlaneseq
    %v56 = vshrl.u32 %v55, 7
    %v57 = vsub.s32 0, %v56
    %v58 = vrot.slane %v53, %v57
    %v59 = vlaneseq
    %v60 = vshrl.u32 %v59, 7
    %v61 = vsub.s32 1, %v60
    %v62 = vrot.slane %v53, %v61
    %v73 = vunpack.c.l.b16 %v43
    %v74 = vunpack.c.l.b16 %v44
    %v75 = vunpack.c.l.b16 %v45
    %v76 = vunpack.c.l.b16 %v46
    %v77 = vunpack.c.l.b16 %v47
    %v78 = vunpack.c.l.b16 %v48
    %v79 = vunpack.c.l.b16 %v49
    %v80 = vunpack.c.l.b16 %v50
    %v81 = vpack.c.b16 %v74, %v73
    %v82 = vpack.c.b16 %v76, %v75
    %v83 = vpack.c.b16 %v78, %v77
    %v84 = vpack.c.b16 %v80, %v79
    %v87 = vunpack.c.l.b16 %v51
    %v88 = vunpack.c.h.b16 %v51
    %v89 = vunpack.c.l.b16 %v52
    %v90 = vunpack.c.h.b16 %v52
    %v91 = vpack.c.b16 %v89, %v87
    %v92 = vpack.c.b16 %v90, %v88
    %vm95 = vcmask 130048
    %v97 = vsel %vm95, %v81, 0
    %v100 = vsel %vm95, %v82, 0
    %v103 = vsel %vm95, %v83, 0
    %v106 = vsel %vm95, %v84, 0
    %108 = vmatprep.subr.bf16.mxu0 %v92
    %109 = vmatpush1.bf16.msra.mxu0 %v91
    %110 = vmatprep.subr.bf16.mxu0 0
    %111 = vmatpush1.bf16.msra.mxu0 0
    %112 = vmatprep.subr.bf16.mxu0 0
    %113 = vmatpush1.bf16.msra.mxu0 0
    %114 = vmatprep.subr.bf16.mxu0 0
    %115 = vmatpush1.bf16.msra.mxu0 0
    %116 = vmatprep.subr.bf16.mxu0 0
    %117 = vmatpush1.bf16.msra.mxu0 0
    %118 = vmatprep.subr.bf16.mxu0 0
    %119 = vmatpush1.bf16.msra.mxu0 0
    %120 = vmatprep.subr.bf16.mxu0 0
    %121 = vmatpush1.bf16.msra.mxu0 0
    %122 = vmatprep.subr.bf16.mxu0 0
    %123 = vmatpush1.bf16.msra.mxu0 0
    %124 = vmatprep.subr.bf16.mxu0 0
    %125 = vmatpush1.bf16.msra.mxu0 0
    %126 = vmatprep.subr.bf16.mxu0 0
    %127 = vmatpush1.bf16.msra.mxu0 0
    %128 = vmatprep.subr.bf16.mxu0 0
    %129 = vmatpush1.bf16.msra.mxu0 0
    %130 = vmatprep.subr.bf16.mxu0 0
    %131 = vmatpush1.bf16.msra.mxu0 0
    %132 = vmatprep.subr.bf16.mxu0 0
    %133 = vmatpush1.bf16.msra.mxu0 0
    %134 = vmatprep.subr.bf16.mxu0 0
    %135 = vmatpush1.bf16.msra.mxu0 0
    %136 = vmatprep.subr.bf16.mxu0 0
    %137 = vmatpush1.bf16.msra.mxu0 0
    %138 = vmatprep.subr.bf16.mxu0 0
    %139 = vmatpush1.bf16.msra.mxu0 0
    %140 = vmatprep.mubr.bf16.mxu0 0
    %141 = vmatmul.mubr.bf16.gmra.mrb[0].mxu0 %v97
    %v142 = vpop.f32.mrb[0].mxu0
    %v143 = vadd.f32 %v58, %v142
    %v144 = vpop.f32.mrb[0].mxu0
    %v145 = vadd.f32 %v62, %v144
    %v146 = vpop.f32.mrb[0].mxu0
    %v147 = vadd.f32 %v58, %v146
    %v148 = vpop.f32.mrb[0].mxu0
    %v149 = vadd.f32 %v62, %v148
    %150 = vmatprep.mubr.bf16.mxu0 0
    %151 = vmatmul.mubr.bf16.gmra.mrb[0].mxu0 %v100
    %v152 = vpop.f32.mrb[0].mxu0
    %v153 = vadd.f32 %v58, %v152
    %v154 = vpop.f32.mrb[0].mxu0
    %v155 = vadd.f32 %v62, %v154
    %v156 = vpop.f32.mrb[0].mxu0
    %v157 = vadd.f32 %v58, %v156
    %v158 = vpop.f32.mrb[0].mxu0
    %v159 = vadd.f32 %v62, %v158
    %160 = vmatprep.mubr.bf16.mxu0 0
    %161 = vmatmul.mubr.bf16.gmra.mrb[0].mxu0 %v103
    %v162 = vpop.f32.mrb[0].mxu0
    %v163 = vadd.f32 %v58, %v162
    %v164 = vpop.f32.mrb[0].mxu0
    %v165 = vadd.f32 %v62, %v164
    %v166 = vpop.f32.mrb[0].mxu0
    %v167 = vadd.f32 %v58, %v166
    %v168 = vpop.f32.mrb[0].mxu0
    %v169 = vadd.f32 %v62, %v168
    %170 = vmatprep.mubr.bf16.mxu0 0
    %171 = vmatmul.mubr.bf16.gmra.mrb[0].mxu0 %v106
    %v172 = vpop.f32.mrb[0].mxu0
    %v173 = vadd.f32 %v58, %v172
    %v174 = vpop.f32.mrb[0].mxu0
    %v175 = vadd.f32 %v62, %v174
    %v176 = vpop.f32.mrb[0].mxu0
    %v177 = vadd.f32 %v58, %v176
    %v178 = vpop.f32.mrb[0].mxu0
    %v179 = vadd.f32 %v62, %v178
    %180 = vdwg.mxu0
    %181 = vst [vmem:[#allocation2] sm:$0xff] %v143
    %182 = vst [vmem:[#allocation2 + $0x8] sm:$0xff] %v145
    %183 = vst [vmem:[#allocation2 + $0x10] sm:$0xff] %v147
    %184 = vst [vmem:[#allocation2 + $0x18] sm:$0xff] %v149
    %185 = vst [vmem:[#allocation2 + $0x20] sm:$0xff] %v153
    %186 = vst [vmem:[#allocation2 + $0x28] sm:$0xff] %v155
    %187 = vst [vmem:[#allocation2 + $0x30] sm:$0xff] %v157
    %188 = vst [vmem:[#allocation2 + $0x38] sm:$0xff] %v159
    %189 = vst [vmem:[#allocation2 + $0x40] sm:$0xff] %v163
    %190 = vst [vmem:[#allocation2 + $0x48] sm:$0xff] %v165
    %191 = vst [vmem:[#allocation2 + $0x50] sm:$0xff] %v167
    %192 = vst [vmem:[#allocation2 + $0x58] sm:$0xff] %v169
    %193 = vst [vmem:[#allocation2 + $0x60] sm:$0xff] %v173
    %194 = vst [vmem:[#allocation2 + $0x68] sm:$0xff] %v175
    %195 = vst [vmem:[#allocation2 + $0x70] sm:$0xff] %v177
    %196 = vst [vmem:[#allocation2 + $0x78] sm:$0xff] %v179
    %v197 = vld [vmem:[%s1] sm:$0xf]
    %v198 = vld [vmem:[%s3] sm:$0xff]
    %v199 = vld [vmem:[%s3 + $0x8] sm:$0xff]
    %v200 = vld [vmem:[%s5] sm:$0x3]
    %v202 = vlaneseq
    %v203 = vshrl.u32 %v202, 7
    %v204 = vsub.s32 0, %v203
    %v205 = vrot.slane %v200, %v204
    %v206 = vlaneseq
    %v207 = vshrl.u32 %v206, 7
    %v208 = vsub.s32 1, %v207
    %v209 = vrot.slane %v200, %v208
    %v214 = vunpack.c.l.b16 %v198
    %v215 = vunpack.c.h.b16 %v198
    %v216 = vunpack.c.l.b16 %v199
    %v217 = vunpack.c.h.b16 %v199
    %v218 = vpack.c.b16 %v216, %v214
    %v219 = vpack.c.b16 %v217, %v215
    %v223 = vsel %vm95, %v197, 0
    %225 = vmatprep.subr.bf16.mxu0 %v219
    %226 = vmatpush1.bf16.msra.mxu0 %v218
    %227 = vmatprep.subr.bf16.mxu0 0
    %228 = vmatpush1.bf16.msra.mxu0 0
    %229 = vmatprep.subr.bf16.mxu0 0
    %230 = vmatpush1.bf16.msra.mxu0 0
    %231 = vmatprep.subr.bf16.mxu0 0
    %232 = vmatpush1.bf16.msra.mxu0 0
    %233 = vmatprep.subr.bf16.mxu0 0
    %234 = vmatpush1.bf16.msra.mxu0 0
    %235 = vmatprep.subr.bf16.mxu0 0
    %236 = vmatpush1.bf16.msra.mxu0 0
    %237 = vmatprep.subr.bf16.mxu0 0
    %238 = vmatpush1.bf16.msra.mxu0 0
    %239 = vmatprep.subr.bf16.mxu0 0
    %240 = vmatpush1.bf16.msra.mxu0 0
    %241 = vmatprep.subr.bf16.mxu0 0
    %242 = vmatpush1.bf16.msra.mxu0 0
    %243 = vmatprep.subr.bf16.mxu0 0
    %244 = vmatpush1.bf16.msra.mxu0 0
    %245 = vmatprep.subr.bf16.mxu0 0
    %246 = vmatpush1.bf16.msra.mxu0 0
    %247 = vmatprep.subr.bf16.mxu0 0
    %248 = vmatpush1.bf16.msra.mxu0 0
    %249 = vmatprep.subr.bf16.mxu0 0
    %250 = vmatpush1.bf16.msra.mxu0 0
    %251 = vmatprep.subr.bf16.mxu0 0
    %252 = vmatpush1.bf16.msra.mxu0 0
    %253 = vmatprep.subr.bf16.mxu0 0
    %254 = vmatpush1.bf16.msra.mxu0 0
    %255 = vmatprep.subr.bf16.mxu0 0
    %256 = vmatpush1.bf16.msra.mxu0 0
    %257 = vmatprep.mubr.bf16.mxu0 0
    %258 = vmatmul.mubr.bf16.gmra.mrb[0].mxu0 %v223
    %v259 = vpop.f32.mrb[0].mxu0
    %v260 = vadd.f32 %v205, %v259
    %v261 = vpop.f32.mrb[0].mxu0
    %v262 = vadd.f32 %v209, %v261
    %v263 = vpop.f32.mrb[0].mxu0
    %v264 = vpop.f32.mrb[0].mxu0
    %265 = vdwg.mxu0
    %v266 = vxor.u32 %v260, 2147483648
    %v267 = vmul.f32 %v266, 1.442695
    %v268 = vpow.pop %v267
    %v269 = vadd.f32 %v268, 1.0
    %v270 = vrcp.pop %v269
    %v271 = vmul.f32 1.0, %v270
    %v272 = vld [vmem:[%s8] sm:$0x1]
    %v274 = vlaneseq
    %v275 = vshrl.u32 %v274, 7
    %v276 = vsub.s32 0, %v275
    %v277 = vrot.slane %v272, %v276
    %v279 = vmul.f32 %v271, %v277
    %v280 = vadd.f32 %v262, %v279
    %v281 = vtanh.pop %v280
    %v282 = vsub.f32 1.0, %v271
    %284 = vrot.lane.b32.xlu0 %v281, 32
    %v285 = vpop.permute.xlu0 %284
    %v287 = vmul.f32 %v282, %v285
    %v288 = vld [vmem:[%s7] sm:$0x1]
    %v290 = vlaneseq
    %v291 = vshrl.u32 %v290, 7
    %v292 = vsub.s32 0, %v291
    %v293 = vrot.slane %v288, %v292
    %v295 = vld [vmem:[%s6] sm:$0xff]
    %v296 = vld [vmem:[%s6 + $0x8] sm:$0xff]
    %v297 = vld [vmem:[%s6 + $0x10] sm:$0xff]
    %v298 = vld [vmem:[%s6 + $0x18] sm:$0xff]
    %v299 = vld [vmem:[%s6 + $0x20] sm:$0xff]
    %v300 = vld [vmem:[%s6 + $0x28] sm:$0xff]
    %v301 = vld [vmem:[%s6 + $0x30] sm:$0xff]
    %v302 = vld [vmem:[%s6 + $0x38] sm:$0xff]
    %v303 = vld [vmem:[#allocation2] sm:$0xff]
    %v304 = vld [vmem:[#allocation2 + $0x8] sm:$0xff]
    %vm305 = vcmask 261120
    %v307 = vsel %vm305, 0.0, 0
    %309 = vmatprep.subr.mxu0 %v296
    %310 = vmatpush1.msra.mxu0 %v295
    %311 = vmatprep.subr.mxu0 %v298
    %312 = vmatpush1.msra.mxu0 %v297
    %313 = vmatprep.subr.mxu0 %v300
    %314 = vmatpush1.msra.mxu0 %v299
    %315 = vmatprep.subr.mxu0 %v302
    %316 = vmatpush1.msra.mxu0 %v301
    %317 = vmatprep.subr.mxu0 0.0
    %318 = vmatpush1.msra.mxu0 0.0
    %319 = vmatprep.subr.mxu0 0.0
    %320 = vmatpush1.msra.mxu0 0.0
    %321 = vmatprep.subr.mxu0 0.0
    %322 = vmatpush1.msra.mxu0 0.0
    %323 = vmatprep.subr.mxu0 0.0
    %324 = vmatpush1.msra.mxu0 0.0
    %325 = vmatprep.subr.mxu0 0.0
    %326 = vmatpush1.msra.mxu0 0.0
    %327 = vmatprep.subr.mxu0 0.0
    %328 = vmatpush1.msra.mxu0 0.0
    %329 = vmatprep.subr.mxu0 0.0
    %330 = vmatpush1.msra.mxu0 0.0
    %331 = vmatprep.subr.mxu0 0.0
    %332 = vmatpush1.msra.mxu0 0.0
    %333 = vmatprep.subr.mxu0 0.0
    %334 = vmatpush1.msra.mxu0 0.0
    %335 = vmatprep.subr.mxu0 0.0
    %336 = vmatpush1.msra.mxu0 0.0
    %337 = vmatprep.subr.mxu0 0.0
    %338 = vmatpush1.msra.mxu0 0.0
    %339 = vmatprep.subr.mxu0 0.0
    %340 = vmatpush1.msra.mxu0 0.0
    %341 = vmatprep.subr.mxu0 0.0
    %342 = vmatpush1.msra.mxu0 0.0
    %343 = vmatprep.subr.mxu0 0.0
    %344 = vmatpush1.msra.mxu0 0.0
    %345 = vmatprep.subr.mxu0 0.0
    %346 = vmatpush1.msra.mxu0 0.0
    %347 = vmatprep.subr.mxu0 0.0
    %348 = vmatpush1.msra.mxu0 0.0
    %349 = vmatprep.subr.mxu0 0.0
    %350 = vmatpush1.msra.mxu0 0.0
    %351 = vmatprep.subr.mxu0 0.0
    %352 = vmatpush1.msra.mxu0 0.0
    %353 = vmatprep.subr.mxu0 0.0
    %354 = vmatpush1.msra.mxu0 0.0
    %355 = vmatprep.subr.mxu0 0.0
    %356 = vmatpush1.msra.mxu0 0.0
    %357 = vmatprep.subr.mxu0 0.0
    %358 = vmatpush1.msra.mxu0 0.0
    %359 = vmatprep.subr.mxu0 0.0
    %360 = vmatpush1.msra.mxu0 0.0
    %361 = vmatprep.subr.mxu0 0.0
    %362 = vmatpush1.msra.mxu0 0.0
    %363 = vmatprep.subr.mxu0 0.0
    %364 = vmatpush1.msra.mxu0 0.0
    %365 = vmatprep.subr.mxu0 0.0
    %366 = vmatpush1.msra.mxu0 0.0
    %367 = vmatprep.subr.mxu0 0.0
    %368 = vmatpush1.msra.mxu0 0.0
    %369 = vmatprep.subr.mxu0 0.0
    %370 = vmatpush1.msra.mxu0 0.0
    %371 = vmatprep.subr.mxu0 0.0
    %372 = vmatpush1.msra.mxu0 0.0
    %373 = vmatprep.mubr.f32.mxu0 0.0
    %374 = vmatmul.mubr.f32.gmra.mrb[0].mxu0 %v307
    %v375 = vpop.f32.mrb[0].mxu0
    %v376 = vadd.f32 0.0, %v375
    %v377 = vpop.f32.mrb[0].mxu0
    %v378 = vadd.f32 0.0, %v377
    %379 = vdwg.mxu0
    %v380 = vadd.f32 %v303, %v376
    %v381 = vxor.u32 %v380, 2147483648
    %v382 = vmul.f32 %v381, 1.442695
    %v383 = vpow.pop %v382
    %v384 = vadd.f32 %v383, 1.0
    %v385 = vrcp.pop %v384
    %v386 = vmul.f32 1.0, %v385
    %v387 = vadd.f32 %v378, %v293
    %v388 = vmul.f32 %v386, %v387
    %v389 = vadd.f32 %v304, %v388
    %v390 = vtanh.pop %v389
    %v391 = vsub.f32 0.0, %v390
    %393 = vrot.lane.b32.xlu0 %v391, 32
    %v394 = vpop.permute.xlu0 %393
    %v396 = vmul.f32 %v386, %v394
    %398 = vrot.lane.b32.xlu0 %v396, 96
    %v399 = vpop.permute.xlu0 %398
    %v401 = vadd.f32 %v390, %v399
    %v402 = vld [vmem:[#allocation2 + $0x10] sm:$0xff]
    %v403 = vld [vmem:[#allocation2 + $0x18] sm:$0xff]
    %v405 = vsel %vm305, %v401, 0
    %407 = vmatprep.subr.mxu0 %v296
    %408 = vmatpush1.msra.mxu0 %v295
    %409 = vmatprep.subr.mxu0 %v298
    %410 = vmatpush1.msra.mxu0 %v297
    %411 = vmatprep.subr.mxu0 %v300
    %412 = vmatpush1.msra.mxu0 %v299
    %413 = vmatprep.subr.mxu0 %v302
    %414 = vmatpush1.msra.mxu0 %v301
    %415 = vmatprep.subr.mxu0 0.0
    %416 = vmatpush1.msra.mxu0 0.0
    %417 = vmatprep.subr.mxu0 0.0
    %418 = vmatpush1.msra.mxu0 0.0
    %419 = vmatprep.subr.mxu0 0.0
    %420 = vmatpush1.msra.mxu0 0.0
    %421 = vmatprep.subr.mxu0 0.0
    %422 = vmatpush1.msra.mxu0 0.0
    %423 = vmatprep.subr.mxu0 0.0
    %424 = vmatpush1.msra.mxu0 0.0
    %425 = vmatprep.subr.mxu0 0.0
    %426 = vmatpush1.msra.mxu0 0.0
    %427 = vmatprep.subr.mxu0 0.0
    %428 = vmatpush1.msra.mxu0 0.0
    %429 = vmatprep.subr.mxu0 0.0
    %430 = vmatpush1.msra.mxu0 0.0
    %431 = vmatprep.subr.mxu0 0.0
    %432 = vmatpush1.msra.mxu0 0.0
    %433 = vmatprep.subr.mxu0 0.0
    %434 = vmatpush1.msra.mxu0 0.0
    %435 = vmatprep.subr.mxu0 0.0
    %436 = vmatpush1.msra.mxu0 0.0
    %437 = vmatprep.subr.mxu0 0.0
    %438 = vmatpush1.msra.mxu0 0.0
    %439 = vmatprep.subr.mxu0 0.0
    %440 = vmatpush1.msra.mxu0 0.0
    %441 = vmatprep.subr.mxu0 0.0
    %442 = vmatpush1.msra.mxu0 0.0
    %443 = vmatprep.subr.mxu0 0.0
    %444 = vmatpush1.msra.mxu0 0.0
    %445 = vmatprep.subr.mxu0 0.0
    %446 = vmatpush1.msra.mxu0 0.0
    %447 = vmatprep.subr.mxu0 0.0
    %448 = vmatpush1.msra.mxu0 0.0
    %449 = vmatprep.subr.mxu0 0.0
    %450 = vmatpush1.msra.mxu0 0.0
    %451 = vmatprep.subr.mxu0 0.0
    %452 = vmatpush1.msra.mxu0 0.0
    %453 = vmatprep.subr.mxu0 0.0
    %454 = vmatpush1.msra.mxu0 0.0
    %455 = vmatprep.subr.mxu0 0.0
    %456 = vmatpush1.msra.mxu0 0.0
    %457 = vmatprep.subr.mxu0 0.0
    %458 = vmatpush1.msra.mxu0 0.0
    %459 = vmatprep.subr.mxu0 0.0
    %460 = vmatpush1.msra.mxu0 0.0
    %461 = vmatprep.subr.mxu0 0.0
    %462 = vmatpush1.msra.mxu0 0.0
    %463 = vmatprep.subr.mxu0 0.0
    %464 = vmatpush1.msra.mxu0 0.0
    %465 = vmatprep.subr.mxu0 0.0
    %466 = vmatpush1.msra.mxu0 0.0
    %467 = vmatprep.subr.mxu0 0.0
    %468 = vmatpush1.msra.mxu0 0.0
    %469 = vmatprep.subr.mxu0 0.0
    %470 = vmatpush1.msra.mxu0 0.0
    %471 = vmatprep.mubr.f32.mxu0 0.0
    %472 = vmatmul.mubr.f32.gmra.mrb[0].mxu0 %v405
    %v473 = vpop.f32.mrb[0].mxu0
    %v474 = vadd.f32 0.0, %v473
    %v475 = vpop.f32.mrb[0].mxu0
    %v476 = vadd.f32 0.0, %v475
    %477 = vdwg.mxu0
    %v478 = vadd.f32 %v402, %v474
    %v479 = vxor.u32 %v478, 2147483648
    %v480 = vmul.f32 %v479, 1.442695
    %v481 = vpow.pop %v480
    %v482 = vadd.f32 %v481, 1.0
    %v483 = vrcp.pop %v482
    %v484 = vmul.f32 1.0, %v483
    %v485 = vadd.f32 %v476, %v293
    %v486 = vmul.f32 %v484, %v485
    %v487 = vadd.f32 %v403, %v486
    %v488 = vtanh.pop %v487
    %v489 = vsub.f32 %v401, %v488
    %491 = vrot.lane.b32.xlu0 %v489, 32
    %v492 = vpop.permute.xlu0 %491
    %v494 = vmul.f32 %v484, %v492
    %496 = vrot.lane.b32.xlu0 %v494, 96
    %v497 = vpop.permute.xlu0 %496
    %v499 = vadd.f32 %v488, %v497
    %v500 = vld [vmem:[#allocation2 + $0x20] sm:$0xff]
    %v501 = vld [vmem:[#allocation2 + $0x28] sm:$0xff]
    %v503 = vsel %vm305, %v499, 0
    %505 = vmatprep.subr.mxu0 %v296
    %506 = vmatpush1.msra.mxu0 %v295
    %507 = vmatprep.subr.mxu0 %v298
    %508 = vmatpush1.msra.mxu0 %v297
    %509 = vmatprep.subr.mxu0 %v300
    %510 = vmatpush1.msra.mxu0 %v299
    %511 = vmatprep.subr.mxu0 %v302
    %512 = vmatpush1.msra.mxu0 %v301
    %513 = vmatprep.subr.mxu0 0.0
    %514 = vmatpush1.msra.mxu0 0.0
    %515 = vmatprep.subr.mxu0 0.0
    %516 = vmatpush1.msra.mxu0 0.0
    %517 = vmatprep.subr.mxu0 0.0
    %518 = vmatpush1.msra.mxu0 0.0
    %519 = vmatprep.subr.mxu0 0.0
    %520 = vmatpush1.msra.mxu0 0.0
    %521 = vmatprep.subr.mxu0 0.0
    %522 = vmatpush1.msra.mxu0 0.0
    %523 = vmatprep.subr.mxu0 0.0
    %524 = vmatpush1.msra.mxu0 0.0
    %525 = vmatprep.subr.mxu0 0.0
    %526 = vmatpush1.msra.mxu0 0.0
    %527 = vmatprep.subr.mxu0 0.0
    %528 = vmatpush1.msra.mxu0 0.0
    %529 = vmatprep.subr.mxu0 0.0
    %530 = vmatpush1.msra.mxu0 0.0
    %531 = vmatprep.subr.mxu0 0.0
    %532 = vmatpush1.msra.mxu0 0.0
    %533 = vmatprep.subr.mxu0 0.0
    %534 = vmatpush1.msra.mxu0 0.0
    %535 = vmatprep.subr.mxu0 0.0
    %536 = vmatpush1.msra.mxu0 0.0
    %537 = vmatprep.subr.mxu0 0.0
    %538 = vmatpush1.msra.mxu0 0.0
    %539 = vmatprep.subr.mxu0 0.0
    %540 = vmatpush1.msra.mxu0 0.0
    %541 = vmatprep.subr.mxu0 0.0
    %542 = vmatpush1.msra.mxu0 0.0
    %543 = vmatprep.subr.mxu0 0.0
    %544 = vmatpush1.msra.mxu0 0.0
    %545 = vmatprep.subr.mxu0 0.0
    %546 = vmatpush1.msra.mxu0 0.0
    %547 = vmatprep.subr.mxu0 0.0
    %548 = vmatpush1.msra.mxu0 0.0
    %549 = vmatprep.subr.mxu0 0.0
    %550 = vmatpush1.msra.mxu0 0.0
    %551 = vmatprep.subr.mxu0 0.0
    %552 = vmatpush1.msra.mxu0 0.0
    %553 = vmatprep.subr.mxu0 0.0
    %554 = vmatpush1.msra.mxu0 0.0
    %555 = vmatprep.subr.mxu0 0.0
    %556 = vmatpush1.msra.mxu0 0.0
    %557 = vmatprep.subr.mxu0 0.0
    %558 = vmatpush1.msra.mxu0 0.0
    %559 = vmatprep.subr.mxu0 0.0
    %560 = vmatpush1.msra.mxu0 0.0
    %561 = vmatprep.subr.mxu0 0.0
    %562 = vmatpush1.msra.mxu0 0.0
    %563 = vmatprep.subr.mxu0 0.0
    %564 = vmatpush1.msra.mxu0 0.0
    %565 = vmatprep.subr.mxu0 0.0
    %566 = vmatpush1.msra.mxu0 0.0
    %567 = vmatprep.subr.mxu0 0.0
    %568 = vmatpush1.msra.mxu0 0.0
    %569 = vmatprep.mubr.f32.mxu0 0.0
    %570 = vmatmul.mubr.f32.gmra.mrb[0].mxu0 %v503
    %v571 = vpop.f32.mrb[0].mxu0
    %v572 = vadd.f32 0.0, %v571
    %v573 = vpop.f32.mrb[0].mxu0
    %v574 = vadd.f32 0.0, %v573
    %575 = vdwg.mxu0
    %v576 = vadd.f32 %v500, %v572
    %v577 = vxor.u32 %v576, 2147483648
    %v578 = vmul.f32 %v577, 1.442695
    %v579 = vpow.pop %v578
    %v580 = vadd.f32 %v579, 1.0
    %v581 = vrcp.pop %v580
    %v582 = vmul.f32 1.0, %v581
    %v583 = vadd.f32 %v574, %v293
    %v584 = vmul.f32 %v582, %v583
    %v585 = vadd.f32 %v501, %v584
    %v586 = vtanh.pop %v585
    %v587 = vsub.f32 %v499, %v586
    %589 = vrot.lane.b32.xlu0 %v587, 32
    %v590 = vpop.permute.xlu0 %589
    %v592 = vmul.f32 %v582, %v590
    %594 = vrot.lane.b32.xlu0 %v592, 96
    %v595 = vpop.permute.xlu0 %594
    %v597 = vadd.f32 %v586, %v595
    %v598 = vld [vmem:[#allocation2 + $0x30] sm:$0xff]
    %v599 = vld [vmem:[#allocation2 + $0x38] sm:$0xff]
    %v601 = vsel %vm305, %v597, 0
    %603 = vmatprep.subr.mxu0 %v296
    %604 = vmatpush1.msra.mxu0 %v295
    %605 = vmatprep.subr.mxu0 %v298
    %606 = vmatpush1.msra.mxu0 %v297
    %607 = vmatprep.subr.mxu0 %v300
    %608 = vmatpush1.msra.mxu0 %v299
    %609 = vmatprep.subr.mxu0 %v302
    %610 = vmatpush1.msra.mxu0 %v301
    %611 = vmatprep.subr.mxu0 0.0
    %612 = vmatpush1.msra.mxu0 0.0
    %613 = vmatprep.subr.mxu0 0.0
    %614 = vmatpush1.msra.mxu0 0.0
    %615 = vmatprep.subr.mxu0 0.0
    %616 = vmatpush1.msra.mxu0 0.0
    %617 = vmatprep.subr.mxu0 0.0
    %618 = vmatpush1.msra.mxu0 0.0
    %619 = vmatprep.subr.mxu0 0.0
    %620 = vmatpush1.msra.mxu0 0.0
    %621 = vmatprep.subr.mxu0 0.0
    %622 = vmatpush1.msra.mxu0 0.0
    %623 = vmatprep.subr.mxu0 0.0
    %624 = vmatpush1.msra.mxu0 0.0
    %625 = vmatprep.subr.mxu0 0.0
    %626 = vmatpush1.msra.mxu0 0.0
    %627 = vmatprep.subr.mxu0 0.0
    %628 = vmatpush1.msra.mxu0 0.0
    %629 = vmatprep.subr.mxu0 0.0
    %630 = vmatpush1.msra.mxu0 0.0
    %631 = vmatprep.subr.mxu0 0.0
    %632 = vmatpush1.msra.mxu0 0.0
    %633 = vmatprep.subr.mxu0 0.0
    %634 = vmatpush1.msra.mxu0 0.0
    %635 = vmatprep.subr.mxu0 0.0
    %636 = vmatpush1.msra.mxu0 0.0
    %637 = vmatprep.subr.mxu0 0.0
    %638 = vmatpush1.msra.mxu0 0.0
    %639 = vmatprep.subr.mxu0 0.0
    %640 = vmatpush1.msra.mxu0 0.0
    %641 = vmatprep.subr.mxu0 0.0
    %642 = vmatpush1.msra.mxu0 0.0
    %643 = vmatprep.subr.mxu0 0.0
    %644 = vmatpush1.msra.mxu0 0.0
    %645 = vmatprep.subr.mxu0 0.0
    %646 = vmatpush1.msra.mxu0 0.0
    %647 = vmatprep.subr.mxu0 0.0
    %648 = vmatpush1.msra.mxu0 0.0
    %649 = vmatprep.subr.mxu0 0.0
    %650 = vmatpush1.msra.mxu0 0.0
    %651 = vmatprep.subr.mxu0 0.0
    %652 = vmatpush1.msra.mxu0 0.0
    %653 = vmatprep.subr.mxu0 0.0
    %654 = vmatpush1.msra.mxu0 0.0
    %655 = vmatprep.subr.mxu0 0.0
    %656 = vmatpush1.msra.mxu0 0.0
    %657 = vmatprep.subr.mxu0 0.0
    %658 = vmatpush1.msra.mxu0 0.0
    %659 = vmatprep.subr.mxu0 0.0
    %660 = vmatpush1.msra.mxu0 0.0
    %661 = vmatprep.subr.mxu0 0.0
    %662 = vmatpush1.msra.mxu0 0.0
    %663 = vmatprep.subr.mxu0 0.0
    %664 = vmatpush1.msra.mxu0 0.0
    %665 = vmatprep.subr.mxu0 0.0
    %666 = vmatpush1.msra.mxu0 0.0
    %667 = vmatprep.mubr.f32.mxu0 0.0
    %668 = vmatmul.mubr.f32.gmra.mrb[0].mxu0 %v601
    %v669 = vpop.f32.mrb[0].mxu0
    %v670 = vadd.f32 0.0, %v669
    %v671 = vpop.f32.mrb[0].mxu0
    %v672 = vadd.f32 0.0, %v671
    %673 = vdwg.mxu0
    %v674 = vadd.f32 %v598, %v670
    %v675 = vxor.u32 %v674, 2147483648
    %v676 = vmul.f32 %v675, 1.442695
    %v677 = vpow.pop %v676
    %v678 = vadd.f32 %v677, 1.0
    %v679 = vrcp.pop %v678
    %v680 = vmul.f32 1.0, %v679
    %v681 = vadd.f32 %v672, %v293
    %v682 = vmul.f32 %v680, %v681
    %v683 = vadd.f32 %v599, %v682
    %v684 = vtanh.pop %v683
    %v685 = vsub.f32 %v597, %v684
    %687 = vrot.lane.b32.xlu0 %v685, 32
    %v688 = vpop.permute.xlu0 %687
    %v690 = vmul.f32 %v680, %v688
    %692 = vrot.lane.b32.xlu0 %v690, 96
    %v693 = vpop.permute.xlu0 %692
    %v695 = vadd.f32 %v684, %v693
    %v696 = vld [vmem:[#allocation2 + $0x40] sm:$0xff]
    %v697 = vld [vmem:[#allocation2 + $0x48] sm:$0xff]
    %v699 = vsel %vm305, %v695, 0
    %701 = vmatprep.subr.mxu0 %v296
    %702 = vmatpush1.msra.mxu0 %v295
    %703 = vmatprep.subr.mxu0 %v298
    %704 = vmatpush1.msra.mxu0 %v297
    %705 = vmatprep.subr.mxu0 %v300
    %706 = vmatpush1.msra.mxu0 %v299
    %707 = vmatprep.subr.mxu0 %v302
    %708 = vmatpush1.msra.mxu0 %v301
    %709 = vmatprep.subr.mxu0 0.0
    %710 = vmatpush1.msra.mxu0 0.0
    %711 = vmatprep.subr.mxu0 0.0
    %712 = vmatpush1.msra.mxu0 0.0
    %713 = vmatprep.subr.mxu0 0.0
    %714 = vmatpush1.msra.mxu0 0.0
    %715 = vmatprep.subr.mxu0 0.0
    %716 = vmatpush1.msra.mxu0 0.0
    %717 = vmatprep.subr.mxu0 0.0
    %718 = vmatpush1.msra.mxu0 0.0
    %719 = vmatprep.subr.mxu0 0.0
    %720 = vmatpush1.msra.mxu0 0.0
    %721 = vmatprep.subr.mxu0 0.0
    %722 = vmatpush1.msra.mxu0 0.0
    %723 = vmatprep.subr.mxu0 0.0
    %724 = vmatpush1.msra.mxu0 0.0
    %725 = vmatprep.subr.mxu0 0.0
    %726 = vmatpush1.msra.mxu0 0.0
    %727 = vmatprep.subr.mxu0 0.0
    %728 = vmatpush1.msra.mxu0 0.0
    %729 = vmatprep.subr.mxu0 0.0
    %730 = vmatpush1.msra.mxu0 0.0
    %731 = vmatprep.subr.mxu0 0.0
    %732 = vmatpush1.msra.mxu0 0.0
    %733 = vmatprep.subr.mxu0 0.0
    %734 = vmatpush1.msra.mxu0 0.0
    %735 = vmatprep.subr.mxu0 0.0
    %736 = vmatpush1.msra.mxu0 0.0
    %737 = vmatprep.subr.mxu0 0.0
    %738 = vmatpush1.msra.mxu0 0.0
    %739 = vmatprep.subr.mxu0 0.0
    %740 = vmatpush1.msra.mxu0 0.0
    %741 = vmatprep.subr.mxu0 0.0
    %742 = vmatpush1.msra.mxu0 0.0
    %743 = vmatprep.subr.mxu0 0.0
    %744 = vmatpush1.msra.mxu0 0.0
    %745 = vmatprep.subr.mxu0 0.0
    %746 = vmatpush1.msra.mxu0 0.0
    %747 = vmatprep.subr.mxu0 0.0
    %748 = vmatpush1.msra.mxu0 0.0
    %749 = vmatprep.subr.mxu0 0.0
    %750 = vmatpush1.msra.mxu0 0.0
    %751 = vmatprep.subr.mxu0 0.0
    %752 = vmatpush1.msra.mxu0 0.0
    %753 = vmatprep.subr.mxu0 0.0
    %754 = vmatpush1.msra.mxu0 0.0
    %755 = vmatprep.subr.mxu0 0.0
    %756 = vmatpush1.msra.mxu0 0.0
    %757 = vmatprep.subr.mxu0 0.0
    %758 = vmatpush1.msra.mxu0 0.0
    %759 = vmatprep.subr.mxu0 0.0
    %760 = vmatpush1.msra.mxu0 0.0
    %761 = vmatprep.subr.mxu0 0.0
    %762 = vmatpush1.msra.mxu0 0.0
    %763 = vmatprep.subr.mxu0 0.0
    %764 = vmatpush1.msra.mxu0 0.0
    %765 = vmatprep.mubr.f32.mxu0 0.0
    %766 = vmatmul.mubr.f32.gmra.mrb[0].mxu0 %v699
    %v767 = vpop.f32.mrb[0].mxu0
    %v768 = vadd.f32 0.0, %v767
    %v769 = vpop.f32.mrb[0].mxu0
    %v770 = vadd.f32 0.0, %v769
    %771 = vdwg.mxu0
    %v772 = vadd.f32 %v696, %v768
    %v773 = vxor.u32 %v772, 2147483648
    %v774 = vmul.f32 %v773, 1.442695
    %v775 = vpow.pop %v774
    %v776 = vadd.f32 %v775, 1.0
    %v777 = vrcp.pop %v776
    %v778 = vmul.f32 1.0, %v777
    %v779 = vadd.f32 %v770, %v293
    %v780 = vmul.f32 %v778, %v779
    %v781 = vadd.f32 %v697, %v780
    %v782 = vtanh.pop %v781
    %v783 = vsub.f32 %v695, %v782
    %785 = vrot.lane.b32.xlu0 %v783, 32
    %v786 = vpop.permute.xlu0 %785
    %v788 = vmul.f32 %v778, %v786
    %790 = vrot.lane.b32.xlu0 %v788, 96
    %v791 = vpop.permute.xlu0 %790
    %v793 = vadd.f32 %v782, %v791
    %v794 = vld [vmem:[#allocation2 + $0x50] sm:$0xff]
    %v795 = vld [vmem:[#allocation2 + $0x58] sm:$0xff]
    %v797 = vsel %vm305, %v793, 0
    %799 = vmatprep.subr.mxu0 %v296
    %800 = vmatpush1.msra.mxu0 %v295
    %801 = vmatprep.subr.mxu0 %v298
    %802 = vmatpush1.msra.mxu0 %v297
    %803 = vmatprep.subr.mxu0 %v300
    %804 = vmatpush1.msra.mxu0 %v299
    %805 = vmatprep.subr.mxu0 %v302
    %806 = vmatpush1.msra.mxu0 %v301
    %807 = vmatprep.subr.mxu0 0.0
    %808 = vmatpush1.msra.mxu0 0.0
    %809 = vmatprep.subr.mxu0 0.0
    %810 = vmatpush1.msra.mxu0 0.0
    %811 = vmatprep.subr.mxu0 0.0
    %812 = vmatpush1.msra.mxu0 0.0
    %813 = vmatprep.subr.mxu0 0.0
    %814 = vmatpush1.msra.mxu0 0.0
    %815 = vmatprep.subr.mxu0 0.0
    %816 = vmatpush1.msra.mxu0 0.0
    %817 = vmatprep.subr.mxu0 0.0
    %818 = vmatpush1.msra.mxu0 0.0
    %819 = vmatprep.subr.mxu0 0.0
    %820 = vmatpush1.msra.mxu0 0.0
    %821 = vmatprep.subr.mxu0 0.0
    %822 = vmatpush1.msra.mxu0 0.0
    %823 = vmatprep.subr.mxu0 0.0
    %824 = vmatpush1.msra.mxu0 0.0
    %825 = vmatprep.subr.mxu0 0.0
    %826 = vmatpush1.msra.mxu0 0.0
    %827 = vmatprep.subr.mxu0 0.0
    %828 = vmatpush1.msra.mxu0 0.0
    %829 = vmatprep.subr.mxu0 0.0
    %830 = vmatpush1.msra.mxu0 0.0
    %831 = vmatprep.subr.mxu0 0.0
    %832 = vmatpush1.msra.mxu0 0.0
    %833 = vmatprep.subr.mxu0 0.0
    %834 = vmatpush1.msra.mxu0 0.0
    %835 = vmatprep.subr.mxu0 0.0
    %836 = vmatpush1.msra.mxu0 0.0
    %837 = vmatprep.subr.mxu0 0.0
    %838 = vmatpush1.msra.mxu0 0.0
    %839 = vmatprep.subr.mxu0 0.0
    %840 = vmatpush1.msra.mxu0 0.0
    %841 = vmatprep.subr.mxu0 0.0
    %842 = vmatpush1.msra.mxu0 0.0
    %843 = vmatprep.subr.mxu0 0.0
    %844 = vmatpush1.msra.mxu0 0.0
    %845 = vmatprep.subr.mxu0 0.0
    %846 = vmatpush1.msra.mxu0 0.0
    %847 = vmatprep.subr.mxu0 0.0
    %848 = vmatpush1.msra.mxu0 0.0
    %849 = vmatprep.subr.mxu0 0.0
    %850 = vmatpush1.msra.mxu0 0.0
    %851 = vmatprep.subr.mxu0 0.0
    %852 = vmatpush1.msra.mxu0 0.0
    %853 = vmatprep.subr.mxu0 0.0
    %854 = vmatpush1.msra.mxu0 0.0
    %855 = vmatprep.subr.mxu0 0.0
    %856 = vmatpush1.msra.mxu0 0.0
    %857 = vmatprep.subr.mxu0 0.0
    %858 = vmatpush1.msra.mxu0 0.0
    %859 = vmatprep.subr.mxu0 0.0
    %860 = vmatpush1.msra.mxu0 0.0
    %861 = vmatprep.subr.mxu0 0.0
    %862 = vmatpush1.msra.mxu0 0.0
    %863 = vmatprep.mubr.f32.mxu0 0.0
    %864 = vmatmul.mubr.f32.gmra.mrb[0].mxu0 %v797
    %v865 = vpop.f32.mrb[0].mxu0
    %v866 = vadd.f32 0.0, %v865
    %v867 = vpop.f32.mrb[0].mxu0
    %v868 = vadd.f32 0.0, %v867
    %869 = vdwg.mxu0
    %v870 = vadd.f32 %v794, %v866
    %v871 = vxor.u32 %v870, 2147483648
    %v872 = vmul.f32 %v871, 1.442695
    %v873 = vpow.pop %v872
    %v874 = vadd.f32 %v873, 1.0
    %v875 = vrcp.pop %v874
    %v876 = vmul.f32 1.0, %v875
    %v877 = vadd.f32 %v868, %v293
    %v878 = vmul.f32 %v876, %v877
    %v879 = vadd.f32 %v795, %v878
    %v880 = vtanh.pop %v879
    %v881 = vsub.f32 %v793, %v880
    %883 = vrot.lane.b32.xlu0 %v881, 32
    %v884 = vpop.permute.xlu0 %883
    %v886 = vmul.f32 %v876, %v884
    %888 = vrot.lane.b32.xlu0 %v886, 96
    %v889 = vpop.permute.xlu0 %888
    %v891 = vadd.f32 %v880, %v889
    %v892 = vld [vmem:[#allocation2 + $0x60] sm:$0xff]
    %v893 = vld [vmem:[#allocation2 + $0x68] sm:$0xff]
    %v895 = vsel %vm305, %v891, 0
    %897 = vmatprep.subr.mxu0 %v296
    %898 = vmatpush1.msra.mxu0 %v295
    %899 = vmatprep.subr.mxu0 %v298
    %900 = vmatpush1.msra.mxu0 %v297
    %901 = vmatprep.subr.mxu0 %v300
    %902 = vmatpush1.msra.mxu0 %v299
    %903 = vmatprep.subr.mxu0 %v302
    %904 = vmatpush1.msra.mxu0 %v301
    %905 = vmatprep.subr.mxu0 0.0
    %906 = vmatpush1.msra.mxu0 0.0
    %907 = vmatprep.subr.mxu0 0.0
    %908 = vmatpush1.msra.mxu0 0.0
    %909 = vmatprep.subr.mxu0 0.0
    %910 = vmatpush1.msra.mxu0 0.0
    %911 = vmatprep.subr.mxu0 0.0
    %912 = vmatpush1.msra.mxu0 0.0
    %913 = vmatprep.subr.mxu0 0.0
    %914 = vmatpush1.msra.mxu0 0.0
    %915 = vmatprep.subr.mxu0 0.0
    %916 = vmatpush1.msra.mxu0 0.0
    %917 = vmatprep.subr.mxu0 0.0
    %918 = vmatpush1.msra.mxu0 0.0
    %919 = vmatprep.subr.mxu0 0.0
    %920 = vmatpush1.msra.mxu0 0.0
    %921 = vmatprep.subr.mxu0 0.0
    %922 = vmatpush1.msra.mxu0 0.0
    %923 = vmatprep.subr.mxu0 0.0
    %924 = vmatpush1.msra.mxu0 0.0
    %925 = vmatprep.subr.mxu0 0.0
    %926 = vmatpush1.msra.mxu0 0.0
    %927 = vmatprep.subr.mxu0 0.0
    %928 = vmatpush1.msra.mxu0 0.0
    %929 = vmatprep.subr.mxu0 0.0
    %930 = vmatpush1.msra.mxu0 0.0
    %931 = vmatprep.subr.mxu0 0.0
    %932 = vmatpush1.msra.mxu0 0.0
    %933 = vmatprep.subr.mxu0 0.0
    %934 = vmatpush1.msra.mxu0 0.0
    %935 = vmatprep.subr.mxu0 0.0
    %936 = vmatpush1.msra.mxu0 0.0
    %937 = vmatprep.subr.mxu0 0.0
    %938 = vmatpush1.msra.mxu0 0.0
    %939 = vmatprep.subr.mxu0 0.0
    %940 = vmatpush1.msra.mxu0 0.0
    %941 = vmatprep.subr.mxu0 0.0
    %942 = vmatpush1.msra.mxu0 0.0
    %943 = vmatprep.subr.mxu0 0.0
    %944 = vmatpush1.msra.mxu0 0.0
    %945 = vmatprep.subr.mxu0 0.0
    %946 = vmatpush1.msra.mxu0 0.0
    %947 = vmatprep.subr.mxu0 0.0
    %948 = vmatpush1.msra.mxu0 0.0
    %949 = vmatprep.subr.mxu0 0.0
    %950 = vmatpush1.msra.mxu0 0.0
    %951 = vmatprep.subr.mxu0 0.0
    %952 = vmatpush1.msra.mxu0 0.0
    %953 = vmatprep.subr.mxu0 0.0
    %954 = vmatpush1.msra.mxu0 0.0
    %955 = vmatprep.subr.mxu0 0.0
    %956 = vmatpush1.msra.mxu0 0.0
    %957 = vmatprep.subr.mxu0 0.0
    %958 = vmatpush1.msra.mxu0 0.0
    %959 = vmatprep.subr.mxu0 0.0
    %960 = vmatpush1.msra.mxu0 0.0
    %961 = vmatprep.mubr.f32.mxu0 0.0
    %962 = vmatmul.mubr.f32.gmra.mrb[0].mxu0 %v895
    %v963 = vpop.f32.mrb[0].mxu0
    %v964 = vadd.f32 0.0, %v963
    %v965 = vpop.f32.mrb[0].mxu0
    %v966 = vadd.f32 0.0, %v965
    %967 = vdwg.mxu0
    %v968 = vadd.f32 %v892, %v964
    %v969 = vxor.u32 %v968, 2147483648
    %v970 = vmul.f32 %v969, 1.442695
    %v971 = vpow.pop %v970
    %v972 = vadd.f32 %v971, 1.0
    %v973 = vrcp.pop %v972
    %v974 = vmul.f32 1.0, %v973
    %v975 = vadd.f32 %v966, %v293
    %v976 = vmul.f32 %v974, %v975
    %v977 = vadd.f32 %v893, %v976
    %v978 = vtanh.pop %v977
    %v979 = vsub.f32 %v891, %v978
    %981 = vrot.lane.b32.xlu0 %v979, 32
    %v982 = vpop.permute.xlu0 %981
    %v984 = vmul.f32 %v974, %v982
    %986 = vrot.lane.b32.xlu0 %v984, 96
    %v987 = vpop.permute.xlu0 %986
    %v989 = vadd.f32 %v978, %v987
    %v990 = vld [vmem:[#allocation2 + $0x70] sm:$0xff]
    %v991 = vld [vmem:[#allocation2 + $0x78] sm:$0xff]
    %v993 = vsel %vm305, %v989, 0
    %995 = vmatprep.subr.mxu0 %v296
    %996 = vmatpush1.msra.mxu0 %v295
    %997 = vmatprep.subr.mxu0 %v298
    %998 = vmatpush1.msra.mxu0 %v297
    %999 = vmatprep.subr.mxu0 %v300
    %1000 = vmatpush1.msra.mxu0 %v299
    %1001 = vmatprep.subr.mxu0 %v302
    %1002 = vmatpush1.msra.mxu0 %v301
    %1003 = vmatprep.subr.mxu0 0.0
    %1004 = vmatpush1.msra.mxu0 0.0
    %1005 = vmatprep.subr.mxu0 0.0
    %1006 = vmatpush1.msra.mxu0 0.0
    %1007 = vmatprep.subr.mxu0 0.0
    %1008 = vmatpush1.msra.mxu0 0.0
    %1009 = vmatprep.subr.mxu0 0.0
    %1010 = vmatpush1.msra.mxu0 0.0
    %1011 = vmatprep.subr.mxu0 0.0
    %1012 = vmatpush1.msra.mxu0 0.0
    %1013 = vmatprep.subr.mxu0 0.0
    %1014 = vmatpush1.msra.mxu0 0.0
    %1015 = vmatprep.subr.mxu0 0.0
    %1016 = vmatpush1.msra.mxu0 0.0
    %1017 = vmatprep.subr.mxu0 0.0
    %1018 = vmatpush1.msra.mxu0 0.0
    %1019 = vmatprep.subr.mxu0 0.0
    %1020 = vmatpush1.msra.mxu0 0.0
    %1021 = vmatprep.subr.mxu0 0.0
    %1022 = vmatpush1.msra.mxu0 0.0
    %1023 = vmatprep.subr.mxu0 0.0
    %1024 = vmatpush1.msra.mxu0 0.0
    %1025 = vmatprep.subr.mxu0 0.0
    %1026 = vmatpush1.msra.mxu0 0.0
    %1027 = vmatprep.subr.mxu0 0.0
    %1028 = vmatpush1.msra.mxu0 0.0
    %1029 = vmatprep.subr.mxu0 0.0
    %1030 = vmatpush1.msra.mxu0 0.0
    %1031 = vmatprep.subr.mxu0 0.0
    %1032 = vmatpush1.msra.mxu0 0.0
    %1033 = vmatprep.subr.mxu0 0.0
    %1034 = vmatpush1.msra.mxu0 0.0
    %1035 = vmatprep.subr.mxu0 0.0
    %1036 = vmatpush1.msra.mxu0 0.0
    %1037 = vmatprep.subr.mxu0 0.0
    %1038 = vmatpush1.msra.mxu0 0.0
    %1039 = vmatprep.subr.mxu0 0.0
    %1040 = vmatpush1.msra.mxu0 0.0
    %1041 = vmatprep.subr.mxu0 0.0
    %1042 = vmatpush1.msra.mxu0 0.0
    %1043 = vmatprep.subr.mxu0 0.0
    %1044 = vmatpush1.msra.mxu0 0.0
    %1045 = vmatprep.subr.mxu0 0.0
    %1046 = vmatpush1.msra.mxu0 0.0
    %1047 = vmatprep.subr.mxu0 0.0
    %1048 = vmatpush1.msra.mxu0 0.0
    %1049 = vmatprep.subr.mxu0 0.0
    %1050 = vmatpush1.msra.mxu0 0.0
    %1051 = vmatprep.subr.mxu0 0.0
    %1052 = vmatpush1.msra.mxu0 0.0
    %1053 = vmatprep.subr.mxu0 0.0
    %1054 = vmatpush1.msra.mxu0 0.0
    %1055 = vmatprep.subr.mxu0 0.0
    %1056 = vmatpush1.msra.mxu0 0.0
    %1057 = vmatprep.subr.mxu0 0.0
    %1058 = vmatpush1.msra.mxu0 0.0
    %1059 = vmatprep.mubr.f32.mxu0 0.0
    %1060 = vmatmul.mubr.f32.gmra.mrb[0].mxu0 %v993
    %v1061 = vpop.f32.mrb[0].mxu0
    %v1062 = vadd.f32 0.0, %v1061
    %v1063 = vpop.f32.mrb[0].mxu0
    %v1064 = vadd.f32 0.0, %v1063
    %1065 = vdwg.mxu0
    %v1066 = vadd.f32 %v990, %v1062
    %v1067 = vxor.u32 %v1066, 2147483648
    %v1068 = vmul.f32 %v1067, 1.442695
    %v1069 = vpow.pop %v1068
    %v1070 = vadd.f32 %v1069, 1.0
    %v1071 = vrcp.pop %v1070
    %v1072 = vmul.f32 1.0, %v1071
    %v1073 = vadd.f32 %v1064, %v293
    %v1074 = vmul.f32 %v1072, %v1073
    %v1075 = vadd.f32 %v991, %v1074
    %v1076 = vtanh.pop %v1075
    %v1077 = vsub.f32 %v989, %v1076
    %1079 = vrot.lane.b32.xlu0 %v1077, 32
    %v1080 = vpop.permute.xlu0 %1079
    %v1082 = vmul.f32 %v1072, %v1080
    %1084 = vrot.lane.b32.xlu0 %v1082, 96
    %v1085 = vpop.permute.xlu0 %1084
    %v1087 = vadd.f32 %v1076, %v1085
    %v1088 = vld [vmem:[%s9] sm:$0xff]
    %v1089 = vld [vmem:[%s9 + $0x8] sm:$0xff]
    %v1090 = vld [vmem:[%s9 + $0x10] sm:$0xff]
    %v1091 = vld [vmem:[%s9 + $0x18] sm:$0xff]
    %v1092 = vld [vmem:[%s10] sm:$0xff]
    %v1093 = vld [vmem:[%s10 + $0x8] sm:$0xff]
    %v1094 = vld [vmem:[%s10 + $0x10] sm:$0xff]
    %v1095 = vld [vmem:[%s10 + $0x18] sm:$0xff]
    %1097 = vrot.lane.b32.xlu0 %v287, 96
    %v1098 = vpop.permute.xlu0 %1097
    %v1099 = vsel %vm305, %v1098, 0
    %1101 = vmatprep.subr.mxu0 0.0
    %1102 = vmatpush1.msra.mxu0 %v1092
    %1103 = vmatprep.subr.mxu0 0.0
    %1104 = vmatpush1.msra.mxu0 %v1093
    %1105 = vmatprep.subr.mxu0 0.0
    %1106 = vmatpush1.msra.mxu0 %v1094
    %1107 = vmatprep.subr.mxu0 0.0
    %1108 = vmatpush1.msra.mxu0 %v1095
    %1109 = vmatprep.subr.mxu0 0.0
    %1110 = vmatpush1.msra.mxu0 0.0
    %1111 = vmatprep.subr.mxu0 0.0
    %1112 = vmatpush1.msra.mxu0 0.0
    %1113 = vmatprep.subr.mxu0 0.0
    %1114 = vmatpush1.msra.mxu0 0.0
    %1115 = vmatprep.subr.mxu0 0.0
    %1116 = vmatpush1.msra.mxu0 0.0
    %1117 = vmatprep.subr.mxu0 0.0
    %1118 = vmatpush1.msra.mxu0 0.0
    %1119 = vmatprep.subr.mxu0 0.0
    %1120 = vmatpush1.msra.mxu0 0.0
    %1121 = vmatprep.subr.mxu0 0.0
    %1122 = vmatpush1.msra.mxu0 0.0
    %1123 = vmatprep.subr.mxu0 0.0
    %1124 = vmatpush1.msra.mxu0 0.0
    %1125 = vmatprep.subr.mxu0 0.0
    %1126 = vmatpush1.msra.mxu0 0.0
    %1127 = vmatprep.subr.mxu0 0.0
    %1128 = vmatpush1.msra.mxu0 0.0
    %1129 = vmatprep.subr.mxu0 0.0
    %1130 = vmatpush1.msra.mxu0 0.0
    %1131 = vmatprep.subr.mxu0 0.0
    %1132 = vmatpush1.msra.mxu0 0.0
    %1133 = vmatprep.subr.mxu0 0.0
    %1134 = vmatpush1.msra.mxu0 0.0
    %1135 = vmatprep.subr.mxu0 0.0
    %1136 = vmatpush1.msra.mxu0 0.0
    %1137 = vmatprep.subr.mxu0 0.0
    %1138 = vmatpush1.msra.mxu0 0.0
    %1139 = vmatprep.subr.mxu0 0.0
    %1140 = vmatpush1.msra.mxu0 0.0
    %1141 = vmatprep.subr.mxu0 0.0
    %1142 = vmatpush1.msra.mxu0 0.0
    %1143 = vmatprep.subr.mxu0 0.0
    %1144 = vmatpush1.msra.mxu0 0.0
    %1145 = vmatprep.subr.mxu0 0.0
    %1146 = vmatpush1.msra.mxu0 0.0
    %1147 = vmatprep.subr.mxu0 0.0
    %1148 = vmatpush1.msra.mxu0 0.0
    %1149 = vmatprep.subr.mxu0 0.0
    %1150 = vmatpush1.msra.mxu0 0.0
    %1151 = vmatprep.subr.mxu0 0.0
    %1152 = vmatpush1.msra.mxu0 0.0
    %1153 = vmatprep.subr.mxu0 0.0
    %1154 = vmatpush1.msra.mxu0 0.0
    %1155 = vmatprep.subr.mxu0 0.0
    %1156 = vmatpush1.msra.mxu0 0.0
    %1157 = vmatprep.subr.mxu0 0.0
    %1158 = vmatpush1.msra.mxu0 0.0
    %1159 = vmatprep.subr.mxu0 0.0
    %1160 = vmatpush1.msra.mxu0 0.0
    %1161 = vmatprep.subr.mxu0 0.0
    %1162 = vmatpush1.msra.mxu0 0.0
    %1163 = vmatprep.subr.mxu0 0.0
    %1164 = vmatpush1.msra.mxu0 0.0
    %1165 = vmatprep.mubr.f32.mxu0 0.0
    %1166 = vmatmul.mubr.f32.gmra.mrb[0].mxu0 %v1099
    %v1167 = vpop.f32.mrb[0].mxu0
    %v1168 = vadd.f32 0.0, %v1167
    %v1169 = vpop.f32.mrb[0].mxu0
    %1170 = vdwg.mxu0
    %v1172 = vsel %vm305, %v1087, 0
    %1174 = vmatprep.subr.mxu0 0.0
    %1175 = vmatpush1.msra.mxu0 %v1088
    %1176 = vmatprep.subr.mxu0 0.0
    %1177 = vmatpush1.msra.mxu0 %v1089
    %1178 = vmatprep.subr.mxu0 0.0
    %1179 = vmatpush1.msra.mxu0 %v1090
    %1180 = vmatprep.subr.mxu0 0.0
    %1181 = vmatpush1.msra.mxu0 %v1091
    %1182 = vmatprep.subr.mxu0 0.0
    %1183 = vmatpush1.msra.mxu0 0.0
    %1184 = vmatprep.subr.mxu0 0.0
    %1185 = vmatpush1.msra.mxu0 0.0
    %1186 = vmatprep.subr.mxu0 0.0
    %1187 = vmatpush1.msra.mxu0 0.0
    %1188 = vmatprep.subr.mxu0 0.0
    %1189 = vmatpush1.msra.mxu0 0.0
    %1190 = vmatprep.subr.mxu0 0.0
    %1191 = vmatpush1.msra.mxu0 0.0
    %1192 = vmatprep.subr.mxu0 0.0
    %1193 = vmatpush1.msra.mxu0 0.0
    %1194 = vmatprep.subr.mxu0 0.0
    %1195 = vmatpush1.msra.mxu0 0.0
    %1196 = vmatprep.subr.mxu0 0.0
    %1197 = vmatpush1.msra.mxu0 0.0
    %1198 = vmatprep.subr.mxu0 0.0
    %1199 = vmatpush1.msra.mxu0 0.0
    %1200 = vmatprep.subr.mxu0 0.0
    %1201 = vmatpush1.msra.mxu0 0.0
    %1202 = vmatprep.subr.mxu0 0.0
    %1203 = vmatpush1.msra.mxu0 0.0
    %1204 = vmatprep.subr.mxu0 0.0
    %1205 = vmatpush1.msra.mxu0 0.0
    %1206 = vmatprep.subr.mxu0 0.0
    %1207 = vmatpush1.msra.mxu0 0.0
    %1208 = vmatprep.subr.mxu0 0.0
    %1209 = vmatpush1.msra.mxu0 0.0
    %1210 = vmatprep.subr.mxu0 0.0
    %1211 = vmatpush1.msra.mxu0 0.0
    %1212 = vmatprep.subr.mxu0 0.0
    %1213 = vmatpush1.msra.mxu0 0.0
    %1214 = vmatprep.subr.mxu0 0.0
    %1215 = vmatpush1.msra.mxu0 0.0
    %1216 = vmatprep.subr.mxu0 0.0
    %1217 = vmatpush1.msra.mxu0 0.0
    %1218 = vmatprep.subr.mxu0 0.0
    %1219 = vmatpush1.msra.mxu0 0.0
    %1220 = vmatprep.subr.mxu0 0.0
    %1221 = vmatpush1.msra.mxu0 0.0
    %1222 = vmatprep.subr.mxu0 0.0
    %1223 = vmatpush1.msra.mxu0 0.0
    %1224 = vmatprep.subr.mxu0 0.0
    %1225 = vmatpush1.msra.mxu0 0.0
    %1226 = vmatprep.subr.mxu0 0.0
    %1227 = vmatpush1.msra.mxu0 0.0
    %1228 = vmatprep.subr.mxu0 0.0
    %1229 = vmatpush1.msra.mxu0 0.0
    %1230 = vmatprep.subr.mxu0 0.0
    %1231 = vmatpush1.msra.mxu0 0.0
    %1232 = vmatprep.subr.mxu0 0.0
    %1233 = vmatpush1.msra.mxu0 0.0
    %1234 = vmatprep.subr.mxu0 0.0
    %1235 = vmatpush1.msra.mxu0 0.0
    %1236 = vmatprep.subr.mxu0 0.0
    %1237 = vmatpush1.msra.mxu0 0.0
    %1238 = vmatprep.mubr.f32.mxu0 0.0
    %1239 = vmatmul.mubr.f32.gmra.mrb[0].mxu0 %v1172
    %v1240 = vpop.f32.mrb[0].mxu0
    %v1241 = vadd.f32 %v1168, %v1240
    %v1242 = vpop.f32.mrb[0].mxu0
    %1243 = vdwg.mxu0
    %v1244 = vld [vmem:[%s11] sm:$0x1]
    %v1246 = vlaneseq
    %v1247 = vshrl.u32 %v1246, 7
    %v1248 = vsub.s32 0, %v1247
    %v1249 = vrot.slane %v1244, %v1248
    %v1251 = vadd.f32 %v1241, %v1249
    %vm1252 = vcmask 39936
    %1253 = vst.msk [vmem:[#allocation3] sm:$0xff] %vm1252, %v1251
    // Predicated region
    $region50: #{tpu_custom_call.1} parent=1 // pred_check
      _
    $region51: #{tpu_custom_call.1} parent=1 // pred_check_branch
      %1255 = sbr.rel (0) target = $region53
    $region52: #{tpu_custom_call.1} parent=1 // pred_region
      %s1257 = ssub.s32 128, 128
      %1258 = vsyncadd [#allocation4], %s1257
      %s1260 = sshll.u32 [#allocation3], 4
      %s1261 = int_to_ptr.vmem [resolvable:$true] %s1260
      %1263 = dma.vmem_to_hbm [thread:$0]  %s1261, 128, %s12, [#allocation4]
    $region53: #{tpu_custom_call.1} parent=1 // pred_fallthru
      _
    // Predicated region
    $region54: #{tpu_custom_call.1} parent=1 // pred_check
      _
    $region55: #{tpu_custom_call.1} parent=1 // pred_check_branch
      %1265 = sbr.rel (0) target = $region57
    $region56: #{tpu_custom_call.1} parent=1 // pred_region
      %1266 = dma.done [#allocation4], 128
    $region57: #{tpu_custom_call.1} parent=1 // pred_fallthru
      _
    %1267 = vsyncpa [#allocation4], 1

</llo_original>
